<compile_context>
chip_gen: v5e
topology: v5e:2x2
jax: 0.10.0
libtpu: 0.0.40
codegen_flags: <defaults>
</compile_context>

<pallas_src>
import functools

import jax
import jax.numpy as jnp
from jax import lax
from jax.experimental import pallas as pl
from jax.experimental.pallas import tpu as pltpu


# ---------------------------------------------------------------------------
# in-kernel helpers
# ---------------------------------------------------------------------------

def _layer_norm(x, gamma, beta, *, inv_n, eps=1e-5):
    # x: (rows, D) f32, gamma/beta: (1, D) f32.  mean via sum * (1/N), rsqrt on EUP.
    mu = jnp.sum(x, axis=-1, keepdims=True) * inv_n
    xc = x - mu
    var = jnp.sum(xc * xc, axis=-1, keepdims=True) * inv_n
    return xc * lax.rsqrt(var + eps) * gamma + beta


def _softmax_last(x):
    # x: (rows, S) f32.  exp on EUP; approx reciprocal for the denominator (EUP slot).
    m = jnp.max(x, axis=-1, keepdims=True)
    e = jnp.exp(x - m)
    return e * pl.reciprocal(jnp.sum(e, axis=-1, keepdims=True), approx=True)


def _ffn(x1, w1_ref, b1_ref, w2_ref, b2_ref, *, ffn_chunk: int):
    """x1 @ W1 + b1 -> ReLU -> @ W2 + b2, optionally chunked over the F dim."""
    rows = x1.shape[0]
    F = w1_ref.shape[1]
    D = w2_ref.shape[1]
    x1_bf = x1.astype(jnp.bfloat16)
    if ffn_chunk >= F:
        h = jnp.dot(x1_bf, w1_ref[...], preferred_element_type=jnp.float32) + b1_ref[...]
        h = jnp.maximum(h, 0.0).astype(jnp.bfloat16)
        return jnp.dot(h, w2_ref[...], preferred_element_type=jnp.float32) + b2_ref[...]
    # Chunk F to bound the live (rows, F) intermediate (static, lane-aligned slices).
    acc = jnp.zeros((rows, D), jnp.float32)
    for c in range(F // ffn_chunk):
        sl = slice(c * ffn_chunk, (c + 1) * ffn_chunk)
        h = jnp.dot(x1_bf, w1_ref[:, sl], preferred_element_type=jnp.float32) + b1_ref[:, sl]
        h = jnp.maximum(h, 0.0).astype(jnp.bfloat16)
        acc = acc + jnp.dot(h, w2_ref[sl, :], preferred_element_type=jnp.float32)
    return acc + b2_ref[...]


# ---------------------------------------------------------------------------
# kernel
# ---------------------------------------------------------------------------

def encoder_layer_kernel(
    x_ref,
    wqkv_ref, bqkv_ref, wo_ref, bo_ref,
    g1_ref, be1_ref,
    w1_ref, b1_ref, w2_ref, b2_ref,
    g2_ref, be2_ref,
    out_ref,
    *, num_head: int, head_dim: int, q_chunk: int, ffn_chunk: int,
):
    x = x_ref[0]                                  # (S, D) f32
    S, D = x.shape
    inv_d = 1.0 / float(D)
    scale = float(head_dim) ** (-0.5)

    # ---- fused QKV projection: bf16 operands, f32 MXU accumulation ----
    x_bf = x.astype(jnp.bfloat16)
    qkv = jnp.dot(x_bf, wqkv_ref[...], preferred_element_type=jnp.float32) + bqkv_ref[...]

    # Scale Q and cast Q/K/V to bf16 exactly once (head loop slices bf16 tensors).
    q_bf = (qkv[:, :D] * scale).astype(jnp.bfloat16)       # (S, D)
    k_bf = qkv[:, D:2 * D].astype(jnp.bfloat16)            # (S, D)
    v_bf = qkv[:, 2 * D:].astype(jnp.bfloat16)             # (S, D)

    # ---- process query rows in chunks; everything after QKV is row-wise ----
    for q0 in range(0, S, q_chunk):
        qs = slice(q0, q0 + q_chunk)
        x_q = x[qs, :]                                      # (tq, D) f32

        # Multi-head attention: each head's (P @ V_h) is folded directly into the
        # output projection via a sublane slice of Wo (no (S, D) scratch, no concat).
        acc = jnp.zeros((q_chunk, D), jnp.float32)
        for h in range(num_head):
            hs = slice(h * head_dim, (h + 1) * head_dim)
            qh = q_bf[qs, hs]                               # (tq, hd) bf16
            scores = lax.dot_general(                       # contract last dims: (tq, S)
                qh, k_bf[:, hs], (((1,), (1,)), ((), ())),
                preferred_element_type=jnp.float32)
            probs = _softmax_last(scores)
            att_h = jnp.dot(probs.astype(jnp.bfloat16), v_bf[:, hs],
                            preferred_element_type=jnp.float32)     # (tq, hd) f32
            acc = acc + jnp.dot(att_h.astype(jnp.bfloat16), wo_ref[hs, :],
                                preferred_element_type=jnp.float32)  # (tq, D) f32
        attout = acc + bo_ref[...]

        # residual + LayerNorm 1 (dropout1 = identity in eval)
        x1 = _layer_norm(x_q + attout, g1_ref[...], be1_ref[...], inv_n=inv_d)

        # feed-forward (dropout2 = identity)
        ff = _ffn(x1, w1_ref, b1_ref, w2_ref, b2_ref, ffn_chunk=ffn_chunk)

        # residual + LayerNorm 2 (dropout3 = identity), lane-dense store
        x2 = _layer_norm(x1 + ff, g2_ref[...], be2_ref[...], inv_n=inv_d)
        out_ref[0, qs, :] = x2.astype(out_ref.dtype)


# ---------------------------------------------------------------------------
# wrapper
# ---------------------------------------------------------------------------

def _vmem_capacity_bytes():
    try:
        info = pltpu.get_tpu_info()
        cap = getattr(info, "vmem_capacity_bytes", None)
        if cap:
            return int(cap)
    except Exception:
        pass
    return 64 * 2 ** 20   # conservative default (v7x per-TC VMEM)


def _pick_q_chunk(S):
    if S <= 512:
        return S
    for c in (512, 256, 128):
        if S % c == 0:
            return c
    return S


def transformer_encoder_layer(x, kparams, *, num_head: int, single_buffer_weights=True):
    """x: (B, S, D) float32. kparams: kernel-ready params from prepare_kernel_params."""
    B, S, D = x.shape
    F = kparams["w1"].shape[1]
    assert D % num_head == 0, "d_model must be divisible by num_head"
    head_dim = D // num_head

    vmem_cap = _vmem_capacity_bytes()
    q_chunk = _pick_q_chunk(S)

    # Size the FFN chunk from the real VMEM budget (bounds the (q_chunk, F) f32 slab).
    ffn_chunk = F
    ffn_budget = vmem_cap // 16
    if q_chunk * F * 4 > ffn_budget:
        for c in (2048, 1024, 512, 256, 128):
            if F % c == 0 and q_chunk * c * 4 <= ffn_budget:
                ffn_chunk = c
                break

    spec_kwargs = {"pipeline_mode": pl.Buffered(1)} if single_buffer_weights else {}

    def const_spec(shape):
        # Weights/biases/LN params: constant index map across the batch grid.
        return pl.BlockSpec(shape, lambda b: (0,) * len(shape), **spec_kwargs)

    kernel = functools.partial(
        encoder_layer_kernel, num_head=num_head, head_dim=head_dim,
        q_chunk=q_chunk, ffn_chunk=ffn_chunk,
    )

    # ---- advisory cost estimate for the XLA scheduler ----
    flops = int(B * (8 * S * D * D + 4 * S * S * D + 4 * S * D * F))
    transcendentals = int(B * num_head * S * S)                 # softmax exps
    weight_bytes = (4 * D * D + 2 * D * F) * 2 + (7 * D + F) * 4  # bf16 W + f32 b/LN
    bytes_accessed = int(2 * B * S * D * 4 + weight_bytes)
    cost = pl.CostEstimate(flops=flops, transcendentals=transcendentals,
                           bytes_accessed=bytes_accessed)

    # ---- VMEM budget: weights (single- or double-buffered), x/out tiles (double-
    #      buffered by the pipeline), and in-flight intermediates, plus headroom ----
    wbuf = 1 if single_buffer_weights else 2
    act_block_bytes = S * D * 4
    work_bytes = (S * 3 * D * 4                 # qkv f32
                  + 3 * S * D * 2               # q/k/v bf16
                  + 2 * q_chunk * S * 4         # scores + probs
                  + 2 * q_chunk * ffn_chunk * 4 # ffn intermediate
                  + 6 * q_chunk * D * 4)        # attout/x1/ff/x2 temporaries
    vmem_bytes = int((wbuf * weight_bytes + 4 * act_block_bytes + work_bytes) * 1.4)
    vmem_bytes = max(vmem_bytes, 16 * 2 ** 20)
    vmem_bytes = min(vmem_bytes, int(vmem_cap * 0.9))

    return pl.pallas_call(
        kernel,
        out_shape=jax.ShapeDtypeStruct((B, S, D), x.dtype),
        grid_spec=pltpu.PrefetchScalarGridSpec(
            num_scalar_prefetch=0,
            grid=(B,),
            in_specs=[
                pl.BlockSpec((1, S, D), lambda b: (b, 0, 0)),   # x
                const_spec((D, 3 * D)), const_spec((1, 3 * D)),  # fused wqkv (bf16), bqkv
                const_spec((D, D)), const_spec((1, D)),          # wo (bf16), bo
                const_spec((1, D)), const_spec((1, D)),          # norm1 gamma, beta
                const_spec((D, F)), const_spec((1, F)),          # linear1 w (bf16), b
                const_spec((F, D)), const_spec((1, D)),          # linear2 w (bf16), b
                const_spec((1, D)), const_spec((1, D)),          # norm2 gamma, beta
            ],
            out_specs=pl.BlockSpec((1, S, D), lambda b: (b, 0, 0)),
        ),
        compiler_params=pltpu.CompilerParams(
            dimension_semantics=("parallel",),
            vmem_limit_bytes=vmem_bytes,
        ),
        cost_estimate=cost,
    )(
        x,
        kparams["wqkv"], kparams["bqkv"], kparams["wo"], kparams["bo"],
        kparams["g1"], kparams["be1"],
        kparams["w1"], kparams["b1"], kparams["w2"], kparams["b2"],
        kparams["g2"], kparams["be2"],
    )


# ---------------------------------------------------------------------------
# params
# ---------------------------------------------------------------------------

def init_params(key, d_model, dim_feedforward):
    """Deterministic xavier-uniform-like init; weights stored as (in, out), f32."""
    def xavier(key, fan_in, fan_out):
        limit = (6.0 / (fan_in + fan_out)) ** 0.5
        return jax.random.uniform(key, (fan_in, fan_out), jnp.float32, -limit, limit)

    ks = jax.random.split(key, 8)
    D, F = d_model, dim_feedforward
    z = lambda n: jnp.zeros((1, n), jnp.float32)
    o = lambda n: jnp.ones((1, n), jnp.float32)
    return {
        "wq": xavier(ks[0], D, D), "bq": z(D),
        "wk": xavier(ks[1], D, D), "bk": z(D),
        "wv": xavier(ks[2], D, D), "bv": z(D),
        "wo": xavier(ks[3], D, D), "bo": z(D),
        "g1": o(D), "be1": z(D),
        "w1": xavier(ks[4], D, F), "b1": z(F),
        "w2": xavier(ks[5], F, D), "b2": z(D),
        "g2": o(D), "be2": z(D),
    }


def prepare_kernel_params(params):
    """One-time conversion: fuse QKV and pre-cast weights to bf16 (no per-call cast)."""
    bf = lambda w: w.astype(jnp.bfloat16)
    return {
        "wqkv": jnp.concatenate([params["wq"], params["wk"], params["wv"]],
                                axis=1).astype(jnp.bfloat16),
        "bqkv": jnp.concatenate([params["bq"], params["bk"], params["bv"]], axis=1),
        "wo": bf(params["wo"]), "bo": params["bo"],
        "g1": params["g1"], "be1": params["be1"],
        "w1": bf(params["w1"]), "b1": params["b1"],
        "w2": bf(params["w2"]), "b2": params["b2"],
        "g2": params["g2"], "be2": params["be2"],
    }


# ---------------------------------------------------------------------------
# pure-JAX reference (mirrors the PyTorch forward, eval mode)
# ---------------------------------------------------------------------------

def _reference(x, p, num_head):
    """Matmuls use bf16 operands with f32 accumulation to mirror MXU numerics."""
    B, S, D = x.shape
    hd = D // num_head
    bf = jnp.bfloat16

    def mm(a, b):
        return jnp.einsum("...sd,df->...sf", a.astype(bf), b.astype(bf),
                          preferred_element_type=jnp.float32)

    q = mm(x, p["wq"]) + p["bq"]
    k = mm(x, p["wk"]) + p["bk"]
    v = mm(x, p["wv"]) + p["bv"]
    q = q * (float(hd) ** -0.5)

    def split(t):  # (B,S,D) -> (B,H,S,hd)
        return t.reshape(B, S, num_head, hd).transpose(0, 2, 1, 3)

    qh, kh, vh = split(q).astype(bf), split(k).astype(bf), split(v).astype(bf)
    scores = jnp.einsum("bhqd,bhkd->bhqk", qh, kh, preferred_element_type=jnp.float32)
    probs = jax.nn.softmax(scores, axis=-1)
    att = jnp.einsum("bhqk,bhkd->bhqd", probs.astype(bf), vh,
                     preferred_element_type=jnp.float32)
    att = att.transpose(0, 2, 1, 3).reshape(B, S, D)
    attout = mm(att, p["wo"]) + p["bo"]

    def ln(t, g, b, eps=1e-5):
        mu = t.mean(-1, keepdims=True)
        var = ((t - mu) ** 2).mean(-1, keepdims=True)
        return (t - mu) / jnp.sqrt(var + eps) * g + b

    x1 = ln(x + attout, p["g1"], p["be1"])
    h = jnp.maximum(mm(x1, p["w1"]) + p["b1"], 0.0)
    ff = mm(h, p["w2"]) + p["b2"]
    return ln(x1 + ff, p["g2"], p["be2"])


if __name__ == "__main__":
    batch, seq, d_model, num_head, dim_ff = 2, 8, 32, 4, 64

    key = jax.random.PRNGKey(0)
    kx, kp = jax.random.split(key)
    x = jax.random.normal(kx, (batch, seq, d_model), jnp.float32)
    params = init_params(kp, d_model, dim_ff)
    kparams = prepare_kernel_params(params)

    def run(single_buffer):
        y = transformer_encoder_layer(x, kparams, num_head=num_head,
                                      single_buffer_weights=single_buffer)
        return jax.block_until_ready(y)

    try:
        out = run(True)
    except Exception:
        # Fallback if this JAX build rejects pl.Buffered(1) single-buffering.
        out = run(False)

    ref = _reference(x, params, num_head)
    assert out.shape == (batch, seq, d_model)
    assert bool(jnp.all(jnp.isfinite(out))), "non-finite output"
    assert jnp.allclose(out, ref, atol=1e-2, rtol=1e-2), "mismatch vs reference"

    print("KERNEL_OK")
</pallas_src>

<mosaic_0001>
module attributes {stable_mosaic.version = 11 : i64} {
  func.func @encoder_layer_kernel(%arg0: i32, %arg1: memref<1x8x32xf32, #tpu.memory_space<vmem>>, %arg2: memref<32x96xbf16, #tpu.memory_space<vmem>>, %arg3: memref<1x96xf32, #tpu.memory_space<vmem>>, %arg4: memref<32x32xbf16, #tpu.memory_space<vmem>>, %arg5: memref<1x32xf32, #tpu.memory_space<vmem>>, %arg6: memref<1x32xf32, #tpu.memory_space<vmem>>, %arg7: memref<1x32xf32, #tpu.memory_space<vmem>>, %arg8: memref<32x64xbf16, #tpu.memory_space<vmem>>, %arg9: memref<1x64xf32, #tpu.memory_space<vmem>>, %arg10: memref<64x32xbf16, #tpu.memory_space<vmem>>, %arg11: memref<1x32xf32, #tpu.memory_space<vmem>>, %arg12: memref<1x32xf32, #tpu.memory_space<vmem>>, %arg13: memref<1x32xf32, #tpu.memory_space<vmem>>, %arg14: memref<1x8x32xf32, #tpu.memory_space<vmem>>) attributes {dimension_semantics = [#tpu.dimension_semantics<parallel>], iteration_bounds = array<i64: 2>, scalar_prefetch = 0 : i64, scratch_operands = 0 : i64, tpu.core_type = #tpu.core_type<tc>, window_params = [{transform_indices = @transform_0, window_bounds = array<i64: 1, 8, 32>}, {pipeline_mode = #tpu.pipeline_mode<synchronous>, transform_indices = @transform_1, window_bounds = array<i64: 32, 96>}, {pipeline_mode = #tpu.pipeline_mode<synchronous>, transform_indices = @transform_2, window_bounds = array<i64: 1, 96>}, {pipeline_mode = #tpu.pipeline_mode<synchronous>, transform_indices = @transform_3, window_bounds = array<i64: 32, 32>}, {pipeline_mode = #tpu.pipeline_mode<synchronous>, transform_indices = @transform_4, window_bounds = array<i64: 1, 32>}, {pipeline_mode = #tpu.pipeline_mode<synchronous>, transform_indices = @transform_5, window_bounds = array<i64: 1, 32>}, {pipeline_mode = #tpu.pipeline_mode<synchronous>, transform_indices = @transform_6, window_bounds = array<i64: 1, 32>}, {pipeline_mode = #tpu.pipeline_mode<synchronous>, transform_indices = @transform_7, window_bounds = array<i64: 32, 64>}, {pipeline_mode = #tpu.pipeline_mode<synchronous>, transform_indices = @transform_8, window_bounds = array<i64: 1, 64>}, {pipeline_mode = #tpu.pipeline_mode<synchronous>, transform_indices = @transform_9, window_bounds = array<i64: 64, 32>}, {pipeline_mode = #tpu.pipeline_mode<synchronous>, transform_indices = @transform_10, window_bounds = array<i64: 1, 32>}, {pipeline_mode = #tpu.pipeline_mode<synchronous>, transform_indices = @transform_11, window_bounds = array<i64: 1, 32>}, {pipeline_mode = #tpu.pipeline_mode<synchronous>, transform_indices = @transform_12, window_bounds = array<i64: 1, 32>}, {transform_indices = @transform_13, window_bounds = array<i64: 1, 8, 32>}]} {
    %c0 = arith.constant 0 : index
    %c0_0 = arith.constant 0 : index
    %c0_1 = arith.constant 0 : index
    %0 = vector.load %arg1[%c0, %c0_0, %c0_1] : memref<1x8x32xf32, #tpu.memory_space<vmem>>, vector<1x8x32xf32>
    %1 = vector.shape_cast %0 : vector<1x8x32xf32> to vector<8x32xf32>
    %2 = arith.truncf %1 : vector<8x32xf32> to vector<8x32xbf16>
    %c0_2 = arith.constant 0 : index
    %c0_3 = arith.constant 0 : index
    %3 = vector.load %arg2[%c0_2, %c0_3] : memref<32x96xbf16, #tpu.memory_space<vmem>>, vector<32x96xbf16>
    %cst = arith.constant dense<0.000000e+00> : vector<8x96xf32>
    %4 = tpu.matmul %2, %3, %cst {dimension_numbers = #tpu.dot_dimension_numbers<[1], [0], [0], [1], [0, 0, 1, 1], [], []>} : vector<8x32xbf16>, vector<32x96xbf16>, vector<8x96xf32> -> vector<8x96xf32>
    %c0_4 = arith.constant 0 : index
    %c0_5 = arith.constant 0 : index
    %5 = vector.load %arg3[%c0_4, %c0_5] : memref<1x96xf32, #tpu.memory_space<vmem>>, vector<1x96xf32>
    %6 = vector.broadcast %5 : vector<1x96xf32> to vector<8x96xf32>
    %7 = arith.addf %4, %6 : vector<8x96xf32>
    %8 = vector.extract_strided_slice %7 {offsets = [0, 0], sizes = [8, 32], strides = [1, 1]} : vector<8x96xf32> to vector<8x32xf32>
    %cst_6 = arith.constant 0.353553385 : f32
    %9 = vector.broadcast %cst_6 : f32 to vector<8x32xf32>
    %10 = arith.mulf %8, %9 : vector<8x32xf32>
    %11 = arith.truncf %10 : vector<8x32xf32> to vector<8x32xbf16>
    %12 = vector.extract_strided_slice %7 {offsets = [0, 32], sizes = [8, 32], strides = [1, 1]} : vector<8x96xf32> to vector<8x32xf32>
    %13 = arith.truncf %12 : vector<8x32xf32> to vector<8x32xbf16>
    %14 = vector.extract_strided_slice %7 {offsets = [0, 64], sizes = [8, 32], strides = [1, 1]} : vector<8x96xf32> to vector<8x32xf32>
    %15 = arith.truncf %14 : vector<8x32xf32> to vector<8x32xbf16>
    %cst_7 = arith.constant 0.000000e+00 : f32
    %16 = vector.broadcast %cst_7 : f32 to vector<8x32xf32>
    %17 = vector.extract_strided_slice %11 {offsets = [0, 0], sizes = [8, 8], strides = [1, 1]} : vector<8x32xbf16> to vector<8x8xbf16>
    %18 = vector.extract_strided_slice %13 {offsets = [0, 0], sizes = [8, 8], strides = [1, 1]} : vector<8x32xbf16> to vector<8x8xbf16>
    %cst_8 = arith.constant dense<0.000000e+00> : vector<8x8xf32>
    %19 = tpu.matmul %17, %18, %cst_8 {dimension_numbers = #tpu.dot_dimension_numbers<[1], [1], [0], [0], [0, 0, 1, 0], [], []>} : vector<8x8xbf16>, vector<8x8xbf16>, vector<8x8xf32> -> vector<8x8xf32>
    %cst_9 = arith.constant dense<0xFF800000> : vector<8xf32>
    %20 = vector.multi_reduction <maximumf>, %19, %cst_9 [1] : vector<8x8xf32> to vector<8xf32>
    %21 = vector.shape_cast %20 : vector<8xf32> to vector<8x1xf32>
    %22 = vector.broadcast %21 : vector<8x1xf32> to vector<8x8xf32>
    %23 = arith.subf %19, %22 : vector<8x8xf32>
    %24 = math.exp %23 : vector<8x8xf32>
    %cst_10 = arith.constant dense<0.000000e+00> : vector<8xf32>
    %25 = vector.multi_reduction <add>, %24, %cst_10 [1] : vector<8x8xf32> to vector<8xf32>
    %26 = vector.shape_cast %25 : vector<8xf32> to vector<8x1xf32>
    %27 = tpu.reciprocal %26 {approx = true} : vector<8x1xf32> -> vector<8x1xf32>
    %28 = vector.broadcast %27 : vector<8x1xf32> to vector<8x8xf32>
    %29 = arith.mulf %24, %28 : vector<8x8xf32>
    %30 = arith.truncf %29 : vector<8x8xf32> to vector<8x8xbf16>
    %31 = vector.extract_strided_slice %15 {offsets = [0, 0], sizes = [8, 8], strides = [1, 1]} : vector<8x32xbf16> to vector<8x8xbf16>
    %cst_11 = arith.constant dense<0.000000e+00> : vector<8x8xf32>
    %32 = tpu.matmul %30, %31, %cst_11 {dimension_numbers = #tpu.dot_dimension_numbers<[1], [0], [0], [1], [0, 0, 1, 1], [], []>} : vector<8x8xbf16>, vector<8x8xbf16>, vector<8x8xf32> -> vector<8x8xf32>
    %33 = arith.truncf %32 : vector<8x8xf32> to vector<8x8xbf16>
    %c0_12 = arith.constant 0 : index
    %c0_13 = arith.constant 0 : index
    %34 = vector.load %arg4[%c0_12, %c0_13] : memref<32x32xbf16, #tpu.memory_space<vmem>>, vector<8x32xbf16>
    %cst_14 = arith.constant dense<0.000000e+00> : vector<8x32xf32>
    %35 = tpu.matmul %33, %34, %cst_14 {dimension_numbers = #tpu.dot_dimension_numbers<[1], [0], [0], [1], [0, 0, 1, 1], [], []>} : vector<8x8xbf16>, vector<8x32xbf16>, vector<8x32xf32> -> vector<8x32xf32>
    %36 = arith.addf %16, %35 : vector<8x32xf32>
    %37 = vector.extract_strided_slice %11 {offsets = [0, 8], sizes = [8, 8], strides = [1, 1]} : vector<8x32xbf16> to vector<8x8xbf16>
    %38 = vector.extract_strided_slice %13 {offsets = [0, 8], sizes = [8, 8], strides = [1, 1]} : vector<8x32xbf16> to vector<8x8xbf16>
    %cst_15 = arith.constant dense<0.000000e+00> : vector<8x8xf32>
    %39 = tpu.matmul %37, %38, %cst_15 {dimension_numbers = #tpu.dot_dimension_numbers<[1], [1], [0], [0], [0, 0, 1, 0], [], []>} : vector<8x8xbf16>, vector<8x8xbf16>, vector<8x8xf32> -> vector<8x8xf32>
    %cst_16 = arith.constant dense<0xFF800000> : vector<8xf32>
    %40 = vector.multi_reduction <maximumf>, %39, %cst_16 [1] : vector<8x8xf32> to vector<8xf32>
    %41 = vector.shape_cast %40 : vector<8xf32> to vector<8x1xf32>
    %42 = vector.broadcast %41 : vector<8x1xf32> to vector<8x8xf32>
    %43 = arith.subf %39, %42 : vector<8x8xf32>
    %44 = math.exp %43 : vector<8x8xf32>
    %cst_17 = arith.constant dense<0.000000e+00> : vector<8xf32>
    %45 = vector.multi_reduction <add>, %44, %cst_17 [1] : vector<8x8xf32> to vector<8xf32>
    %46 = vector.shape_cast %45 : vector<8xf32> to vector<8x1xf32>
    %47 = tpu.reciprocal %46 {approx = true} : vector<8x1xf32> -> vector<8x1xf32>
    %48 = vector.broadcast %47 : vector<8x1xf32> to vector<8x8xf32>
    %49 = arith.mulf %44, %48 : vector<8x8xf32>
    %50 = arith.truncf %49 : vector<8x8xf32> to vector<8x8xbf16>
    %51 = vector.extract_strided_slice %15 {offsets = [0, 8], sizes = [8, 8], strides = [1, 1]} : vector<8x32xbf16> to vector<8x8xbf16>
    %cst_18 = arith.constant dense<0.000000e+00> : vector<8x8xf32>
    %52 = tpu.matmul %50, %51, %cst_18 {dimension_numbers = #tpu.dot_dimension_numbers<[1], [0], [0], [1], [0, 0, 1, 1], [], []>} : vector<8x8xbf16>, vector<8x8xbf16>, vector<8x8xf32> -> vector<8x8xf32>
    %53 = arith.truncf %52 : vector<8x8xf32> to vector<8x8xbf16>
    %c8 = arith.constant 8 : index
    %c0_19 = arith.constant 0 : index
    %54 = vector.load %arg4[%c8, %c0_19] : memref<32x32xbf16, #tpu.memory_space<vmem>>, vector<8x32xbf16>
    %cst_20 = arith.constant dense<0.000000e+00> : vector<8x32xf32>
    %55 = tpu.matmul %53, %54, %cst_20 {dimension_numbers = #tpu.dot_dimension_numbers<[1], [0], [0], [1], [0, 0, 1, 1], [], []>} : vector<8x8xbf16>, vector<8x32xbf16>, vector<8x32xf32> -> vector<8x32xf32>
    %56 = arith.addf %36, %55 : vector<8x32xf32>
    %57 = vector.extract_strided_slice %11 {offsets = [0, 16], sizes = [8, 8], strides = [1, 1]} : vector<8x32xbf16> to vector<8x8xbf16>
    %58 = vector.extract_strided_slice %13 {offsets = [0, 16], sizes = [8, 8], strides = [1, 1]} : vector<8x32xbf16> to vector<8x8xbf16>
    %cst_21 = arith.constant dense<0.000000e+00> : vector<8x8xf32>
    %59 = tpu.matmul %57, %58, %cst_21 {dimension_numbers = #tpu.dot_dimension_numbers<[1], [1], [0], [0], [0, 0, 1, 0], [], []>} : vector<8x8xbf16>, vector<8x8xbf16>, vector<8x8xf32> -> vector<8x8xf32>
    %cst_22 = arith.constant dense<0xFF800000> : vector<8xf32>
    %60 = vector.multi_reduction <maximumf>, %59, %cst_22 [1] : vector<8x8xf32> to vector<8xf32>
    %61 = vector.shape_cast %60 : vector<8xf32> to vector<8x1xf32>
    %62 = vector.broadcast %61 : vector<8x1xf32> to vector<8x8xf32>
    %63 = arith.subf %59, %62 : vector<8x8xf32>
    %64 = math.exp %63 : vector<8x8xf32>
    %cst_23 = arith.constant dense<0.000000e+00> : vector<8xf32>
    %65 = vector.multi_reduction <add>, %64, %cst_23 [1] : vector<8x8xf32> to vector<8xf32>
    %66 = vector.shape_cast %65 : vector<8xf32> to vector<8x1xf32>
    %67 = tpu.reciprocal %66 {approx = true} : vector<8x1xf32> -> vector<8x1xf32>
    %68 = vector.broadcast %67 : vector<8x1xf32> to vector<8x8xf32>
    %69 = arith.mulf %64, %68 : vector<8x8xf32>
    %70 = arith.truncf %69 : vector<8x8xf32> to vector<8x8xbf16>
    %71 = vector.extract_strided_slice %15 {offsets = [0, 16], sizes = [8, 8], strides = [1, 1]} : vector<8x32xbf16> to vector<8x8xbf16>
    %cst_24 = arith.constant dense<0.000000e+00> : vector<8x8xf32>
    %72 = tpu.matmul %70, %71, %cst_24 {dimension_numbers = #tpu.dot_dimension_numbers<[1], [0], [0], [1], [0, 0, 1, 1], [], []>} : vector<8x8xbf16>, vector<8x8xbf16>, vector<8x8xf32> -> vector<8x8xf32>
    %73 = arith.truncf %72 : vector<8x8xf32> to vector<8x8xbf16>
    %c16 = arith.constant 16 : index
    %c0_25 = arith.constant 0 : index
    %74 = vector.load %arg4[%c16, %c0_25] : memref<32x32xbf16, #tpu.memory_space<vmem>>, vector<8x32xbf16>
    %cst_26 = arith.constant dense<0.000000e+00> : vector<8x32xf32>
    %75 = tpu.matmul %73, %74, %cst_26 {dimension_numbers = #tpu.dot_dimension_numbers<[1], [0], [0], [1], [0, 0, 1, 1], [], []>} : vector<8x8xbf16>, vector<8x32xbf16>, vector<8x32xf32> -> vector<8x32xf32>
    %76 = arith.addf %56, %75 : vector<8x32xf32>
    %77 = vector.extract_strided_slice %11 {offsets = [0, 24], sizes = [8, 8], strides = [1, 1]} : vector<8x32xbf16> to vector<8x8xbf16>
    %78 = vector.extract_strided_slice %13 {offsets = [0, 24], sizes = [8, 8], strides = [1, 1]} : vector<8x32xbf16> to vector<8x8xbf16>
    %cst_27 = arith.constant dense<0.000000e+00> : vector<8x8xf32>
    %79 = tpu.matmul %77, %78, %cst_27 {dimension_numbers = #tpu.dot_dimension_numbers<[1], [1], [0], [0], [0, 0, 1, 0], [], []>} : vector<8x8xbf16>, vector<8x8xbf16>, vector<8x8xf32> -> vector<8x8xf32>
    %cst_28 = arith.constant dense<0xFF800000> : vector<8xf32>
    %80 = vector.multi_reduction <maximumf>, %79, %cst_28 [1] : vector<8x8xf32> to vector<8xf32>
    %81 = vector.shape_cast %80 : vector<8xf32> to vector<8x1xf32>
    %82 = vector.broadcast %81 : vector<8x1xf32> to vector<8x8xf32>
    %83 = arith.subf %79, %82 : vector<8x8xf32>
    %84 = math.exp %83 : vector<8x8xf32>
    %cst_29 = arith.constant dense<0.000000e+00> : vector<8xf32>
    %85 = vector.multi_reduction <add>, %84, %cst_29 [1] : vector<8x8xf32> to vector<8xf32>
    %86 = vector.shape_cast %85 : vector<8xf32> to vector<8x1xf32>
    %87 = tpu.reciprocal %86 {approx = true} : vector<8x1xf32> -> vector<8x1xf32>
    %88 = vector.broadcast %87 : vector<8x1xf32> to vector<8x8xf32>
    %89 = arith.mulf %84, %88 : vector<8x8xf32>
    %90 = arith.truncf %89 : vector<8x8xf32> to vector<8x8xbf16>
    %91 = vector.extract_strided_slice %15 {offsets = [0, 24], sizes = [8, 8], strides = [1, 1]} : vector<8x32xbf16> to vector<8x8xbf16>
    %cst_30 = arith.constant dense<0.000000e+00> : vector<8x8xf32>
    %92 = tpu.matmul %90, %91, %cst_30 {dimension_numbers = #tpu.dot_dimension_numbers<[1], [0], [0], [1], [0, 0, 1, 1], [], []>} : vector<8x8xbf16>, vector<8x8xbf16>, vector<8x8xf32> -> vector<8x8xf32>
    %93 = arith.truncf %92 : vector<8x8xf32> to vector<8x8xbf16>
    %c24 = arith.constant 24 : index
    %c0_31 = arith.constant 0 : index
    %94 = vector.load %arg4[%c24, %c0_31] : memref<32x32xbf16, #tpu.memory_space<vmem>>, vector<8x32xbf16>
    %cst_32 = arith.constant dense<0.000000e+00> : vector<8x32xf32>
    %95 = tpu.matmul %93, %94, %cst_32 {dimension_numbers = #tpu.dot_dimension_numbers<[1], [0], [0], [1], [0, 0, 1, 1], [], []>} : vector<8x8xbf16>, vector<8x32xbf16>, vector<8x32xf32> -> vector<8x32xf32>
    %96 = arith.addf %76, %95 : vector<8x32xf32>
    %c0_33 = arith.constant 0 : index
    %c0_34 = arith.constant 0 : index
    %97 = vector.load %arg5[%c0_33, %c0_34] : memref<1x32xf32, #tpu.memory_space<vmem>>, vector<1x32xf32>
    %98 = vector.broadcast %97 : vector<1x32xf32> to vector<8x32xf32>
    %99 = arith.addf %96, %98 : vector<8x32xf32>
    %100 = arith.addf %1, %99 : vector<8x32xf32>
    %c0_35 = arith.constant 0 : index
    %c0_36 = arith.constant 0 : index
    %101 = vector.load %arg6[%c0_35, %c0_36] : memref<1x32xf32, #tpu.memory_space<vmem>>, vector<1x32xf32>
    %c0_37 = arith.constant 0 : index
    %c0_38 = arith.constant 0 : index
    %102 = vector.load %arg7[%c0_37, %c0_38] : memref<1x32xf32, #tpu.memory_space<vmem>>, vector<1x32xf32>
    %cst_39 = arith.constant dense<0.000000e+00> : vector<8xf32>
    %103 = vector.multi_reduction <add>, %100, %cst_39 [1] : vector<8x32xf32> to vector<8xf32>
    %104 = vector.shape_cast %103 : vector<8xf32> to vector<8x1xf32>
    %cst_40 = arith.constant 3.125000e-02 : f32
    %105 = vector.broadcast %cst_40 : f32 to vector<8x1xf32>
    %106 = arith.mulf %104, %105 : vector<8x1xf32>
    %107 = vector.broadcast %106 : vector<8x1xf32> to vector<8x32xf32>
    %108 = arith.subf %100, %107 : vector<8x32xf32>
    %109 = arith.mulf %108, %108 : vector<8x32xf32>
    %cst_41 = arith.constant dense<0.000000e+00> : vector<8xf32>
    %110 = vector.multi_reduction <add>, %109, %cst_41 [1] : vector<8x32xf32> to vector<8xf32>
    %111 = vector.shape_cast %110 : vector<8xf32> to vector<8x1xf32>
    %cst_42 = arith.constant 3.125000e-02 : f32
    %112 = vector.broadcast %cst_42 : f32 to vector<8x1xf32>
    %113 = arith.mulf %111, %112 : vector<8x1xf32>
    %cst_43 = arith.constant 9.99999974E-6 : f32
    %114 = vector.broadcast %cst_43 : f32 to vector<8x1xf32>
    %115 = arith.addf %113, %114 : vector<8x1xf32>
    %116 = math.rsqrt %115 : vector<8x1xf32>
    %117 = vector.broadcast %116 : vector<8x1xf32> to vector<8x32xf32>
    %118 = arith.mulf %108, %117 : vector<8x32xf32>
    %119 = vector.broadcast %101 : vector<1x32xf32> to vector<8x32xf32>
    %120 = arith.mulf %118, %119 : vector<8x32xf32>
    %121 = vector.broadcast %102 : vector<1x32xf32> to vector<8x32xf32>
    %122 = arith.addf %120, %121 : vector<8x32xf32>
    %123 = arith.truncf %122 : vector<8x32xf32> to vector<8x32xbf16>
    %c0_44 = arith.constant 0 : index
    %c0_45 = arith.constant 0 : index
    %124 = vector.load %arg8[%c0_44, %c0_45] : memref<32x64xbf16, #tpu.memory_space<vmem>>, vector<32x64xbf16>
    %cst_46 = arith.constant dense<0.000000e+00> : vector<8x64xf32>
    %125 = tpu.matmul %123, %124, %cst_46 {dimension_numbers = #tpu.dot_dimension_numbers<[1], [0], [0], [1], [0, 0, 1, 1], [], []>} : vector<8x32xbf16>, vector<32x64xbf16>, vector<8x64xf32> -> vector<8x64xf32>
    %c0_47 = arith.constant 0 : index
    %c0_48 = arith.constant 0 : index
    %126 = vector.load %arg9[%c0_47, %c0_48] : memref<1x64xf32, #tpu.memory_space<vmem>>, vector<1x64xf32>
    %127 = vector.broadcast %126 : vector<1x64xf32> to vector<8x64xf32>
    %128 = arith.addf %125, %127 : vector<8x64xf32>
    %cst_49 = arith.constant 0.000000e+00 : f32
    %129 = vector.broadcast %cst_49 : f32 to vector<8x64xf32>
    %130 = arith.maximumf %128, %129 : vector<8x64xf32>
    %131 = arith.truncf %130 : vector<8x64xf32> to vector<8x64xbf16>
    %c0_50 = arith.constant 0 : index
    %c0_51 = arith.constant 0 : index
    %132 = vector.load %arg10[%c0_50, %c0_51] : memref<64x32xbf16, #tpu.memory_space<vmem>>, vector<64x32xbf16>
    %cst_52 = arith.constant dense<0.000000e+00> : vector<8x32xf32>
    %133 = tpu.matmul %131, %132, %cst_52 {dimension_numbers = #tpu.dot_dimension_numbers<[1], [0], [0], [1], [0, 0, 1, 1], [], []>} : vector<8x64xbf16>, vector<64x32xbf16>, vector<8x32xf32> -> vector<8x32xf32>
    %c0_53 = arith.constant 0 : index
    %c0_54 = arith.constant 0 : index
    %134 = vector.load %arg11[%c0_53, %c0_54] : memref<1x32xf32, #tpu.memory_space<vmem>>, vector<1x32xf32>
    %135 = vector.broadcast %134 : vector<1x32xf32> to vector<8x32xf32>
    %136 = arith.addf %133, %135 : vector<8x32xf32>
    %137 = arith.addf %122, %136 : vector<8x32xf32>
    %c0_55 = arith.constant 0 : index
    %c0_56 = arith.constant 0 : index
    %138 = vector.load %arg12[%c0_55, %c0_56] : memref<1x32xf32, #tpu.memory_space<vmem>>, vector<1x32xf32>
    %c0_57 = arith.constant 0 : index
    %c0_58 = arith.constant 0 : index
    %139 = vector.load %arg13[%c0_57, %c0_58] : memref<1x32xf32, #tpu.memory_space<vmem>>, vector<1x32xf32>
    %cst_59 = arith.constant dense<0.000000e+00> : vector<8xf32>
    %140 = vector.multi_reduction <add>, %137, %cst_59 [1] : vector<8x32xf32> to vector<8xf32>
    %141 = vector.shape_cast %140 : vector<8xf32> to vector<8x1xf32>
    %cst_60 = arith.constant 3.125000e-02 : f32
    %142 = vector.broadcast %cst_60 : f32 to vector<8x1xf32>
    %143 = arith.mulf %141, %142 : vector<8x1xf32>
    %144 = vector.broadcast %143 : vector<8x1xf32> to vector<8x32xf32>
    %145 = arith.subf %137, %144 : vector<8x32xf32>
    %146 = arith.mulf %145, %145 : vector<8x32xf32>
    %cst_61 = arith.constant dense<0.000000e+00> : vector<8xf32>
    %147 = vector.multi_reduction <add>, %146, %cst_61 [1] : vector<8x32xf32> to vector<8xf32>
    %148 = vector.shape_cast %147 : vector<8xf32> to vector<8x1xf32>
    %cst_62 = arith.constant 3.125000e-02 : f32
    %149 = vector.broadcast %cst_62 : f32 to vector<8x1xf32>
    %150 = arith.mulf %148, %149 : vector<8x1xf32>
    %cst_63 = arith.constant 9.99999974E-6 : f32
    %151 = vector.broadcast %cst_63 : f32 to vector<8x1xf32>
    %152 = arith.addf %150, %151 : vector<8x1xf32>
    %153 = math.rsqrt %152 : vector<8x1xf32>
    %154 = vector.broadcast %153 : vector<8x1xf32> to vector<8x32xf32>
    %155 = arith.mulf %145, %154 : vector<8x32xf32>
    %156 = vector.broadcast %138 : vector<1x32xf32> to vector<8x32xf32>
    %157 = arith.mulf %155, %156 : vector<8x32xf32>
    %158 = vector.broadcast %139 : vector<1x32xf32> to vector<8x32xf32>
    %159 = arith.addf %157, %158 : vector<8x32xf32>
    %c0_64 = arith.constant 0 : index
    %c0_65 = arith.constant 0 : index
    %c0_66 = arith.constant 0 : index
    %160 = vector.load %arg14[%c0_64, %c0_65, %c0_66] : memref<1x8x32xf32, #tpu.memory_space<vmem>>, vector<1x8x32xf32>
    %161 = vector.shape_cast %160 : vector<1x8x32xf32> to vector<8x32xf32>
    %162 = vector.shape_cast %159 : vector<8x32xf32> to vector<1x8x32xf32>
    tpu.vector_store %arg14[%c0_64, %c0_65, %c0_66], %162 {strides = array<i32>} : memref<1x8x32xf32, #tpu.memory_space<vmem>>, vector<1x8x32xf32>,
    return
  }
  func.func @transform_0(%arg0: i32) -> (i32, i32, i32) {
    %c0_i32 = arith.constant 0 : i32
    %c0_i32_0 = arith.constant 0 : i32
    %c0_i32_1 = arith.constant 0 : i32
    return %arg0, %c0_i32, %c0_i32_0 : i32, i32, i32
  }
  func.func @transform_1(%arg0: i32) -> (i32, i32) {
    %c0_i32 = arith.constant 0 : i32
    %c0_i32_0 = arith.constant 0 : i32
    %c0_i32_1 = arith.constant 0 : i32
    return %c0_i32, %c0_i32_0 : i32, i32
  }
  func.func @transform_2(%arg0: i32) -> (i32, i32) {
    %c0_i32 = arith.constant 0 : i32
    %c0_i32_0 = arith.constant 0 : i32
    %c0_i32_1 = arith.constant 0 : i32
    return %c0_i32, %c0_i32_0 : i32, i32
  }
  func.func @transform_3(%arg0: i32) -> (i32, i32) {
    %c0_i32 = arith.constant 0 : i32
    %c0_i32_0 = arith.constant 0 : i32
    %c0_i32_1 = arith.constant 0 : i32
    return %c0_i32, %c0_i32_0 : i32, i32
  }
  func.func @transform_4(%arg0: i32) -> (i32, i32) {
    %c0_i32 = arith.constant 0 : i32
    %c0_i32_0 = arith.constant 0 : i32
    %c0_i32_1 = arith.constant 0 : i32
    return %c0_i32, %c0_i32_0 : i32, i32
  }
  func.func @transform_5(%arg0: i32) -> (i32, i32) {
    %c0_i32 = arith.constant 0 : i32
    %c0_i32_0 = arith.constant 0 : i32
    %c0_i32_1 = arith.constant 0 : i32
    return %c0_i32, %c0_i32_0 : i32, i32
  }
  func.func @transform_6(%arg0: i32) -> (i32, i32) {
    %c0_i32 = arith.constant 0 : i32
    %c0_i32_0 = arith.constant 0 : i32
    %c0_i32_1 = arith.constant 0 : i32
    return %c0_i32, %c0_i32_0 : i32, i32
  }
  func.func @transform_7(%arg0: i32) -> (i32, i32) {
    %c0_i32 = arith.constant 0 : i32
    %c0_i32_0 = arith.constant 0 : i32
    %c0_i32_1 = arith.constant 0 : i32
    return %c0_i32, %c0_i32_0 : i32, i32
  }
  func.func @transform_8(%arg0: i32) -> (i32, i32) {
    %c0_i32 = arith.constant 0 : i32
    %c0_i32_0 = arith.constant 0 : i32
    %c0_i32_1 = arith.constant 0 : i32
    return %c0_i32, %c0_i32_0 : i32, i32
  }
  func.func @transform_9(%arg0: i32) -> (i32, i32) {
    %c0_i32 = arith.constant 0 : i32
    %c0_i32_0 = arith.constant 0 : i32
    %c0_i32_1 = arith.constant 0 : i32
    return %c0_i32, %c0_i32_0 : i32, i32
  }
  func.func @transform_10(%arg0: i32) -> (i32, i32) {
    %c0_i32 = arith.constant 0 : i32
    %c0_i32_0 = arith.constant 0 : i32
    %c0_i32_1 = arith.constant 0 : i32
    return %c0_i32, %c0_i32_0 : i32, i32
  }
  func.func @transform_11(%arg0: i32) -> (i32, i32) {
    %c0_i32 = arith.constant 0 : i32
    %c0_i32_0 = arith.constant 0 : i32
    %c0_i32_1 = arith.constant 0 : i32
    return %c0_i32, %c0_i32_0 : i32, i32
  }
  func.func @transform_12(%arg0: i32) -> (i32, i32) {
    %c0_i32 = arith.constant 0 : i32
    %c0_i32_0 = arith.constant 0 : i32
    %c0_i32_1 = arith.constant 0 : i32
    return %c0_i32, %c0_i32_0 : i32, i32
  }
  func.func @transform_13(%arg0: i32) -> (i32, i32, i32) {
    %c0_i32 = arith.constant 0 : i32
    %c0_i32_0 = arith.constant 0 : i32
    %c0_i32_1 = arith.constant 0 : i32
    return %arg0, %c0_i32, %c0_i32_0 : i32, i32, i32
  }
}

module attributes {stable_mosaic.version = 11 : i64} {
  func.func @encoder_layer_kernel(%arg0: i32, %arg1: memref<1x8x32xf32, #tpu.memory_space<vmem>>, %arg2: memref<32x96xbf16, #tpu.memory_space<vmem>>, %arg3: memref<1x96xf32, #tpu.memory_space<vmem>>, %arg4: memref<32x32xbf16, #tpu.memory_space<vmem>>, %arg5: memref<1x32xf32, #tpu.memory_space<vmem>>, %arg6: memref<1x32xf32, #tpu.memory_space<vmem>>, %arg7: memref<1x32xf32, #tpu.memory_space<vmem>>, %arg8: memref<32x64xbf16, #tpu.memory_space<vmem>>, %arg9: memref<1x64xf32, #tpu.memory_space<vmem>>, %arg10: memref<64x32xbf16, #tpu.memory_space<vmem>>, %arg11: memref<1x32xf32, #tpu.memory_space<vmem>>, %arg12: memref<1x32xf32, #tpu.memory_space<vmem>>, %arg13: memref<1x32xf32, #tpu.memory_space<vmem>>, %arg14: memref<1x8x32xf32, #tpu.memory_space<vmem>>) attributes {dimension_semantics = [#tpu.dimension_semantics<parallel>], iteration_bounds = array<i64: 2>, scalar_prefetch = 0 : i64, scratch_operands = 0 : i64, tpu.core_type = #tpu.core_type<tc>, window_params = [{transform_indices = @transform_0, window_bounds = array<i64: 1, 8, 32>}, {pipeline_mode = #tpu.pipeline_mode<synchronous>, transform_indices = @transform_1, window_bounds = array<i64: 32, 96>}, {pipeline_mode = #tpu.pipeline_mode<synchronous>, transform_indices = @transform_2, window_bounds = array<i64: 1, 96>}, {pipeline_mode = #tpu.pipeline_mode<synchronous>, transform_indices = @transform_3, window_bounds = array<i64: 32, 32>}, {pipeline_mode = #tpu.pipeline_mode<synchronous>, transform_indices = @transform_4, window_bounds = array<i64: 1, 32>}, {pipeline_mode = #tpu.pipeline_mode<synchronous>, transform_indices = @transform_5, window_bounds = array<i64: 1, 32>}, {pipeline_mode = #tpu.pipeline_mode<synchronous>, transform_indices = @transform_6, window_bounds = array<i64: 1, 32>}, {pipeline_mode = #tpu.pipeline_mode<synchronous>, transform_indices = @transform_7, window_bounds = array<i64: 32, 64>}, {pipeline_mode = #tpu.pipeline_mode<synchronous>, transform_indices = @transform_8, window_bounds = array<i64: 1, 64>}, {pipeline_mode = #tpu.pipeline_mode<synchronous>, transform_indices = @transform_9, window_bounds = array<i64: 64, 32>}, {pipeline_mode = #tpu.pipeline_mode<synchronous>, transform_indices = @transform_10, window_bounds = array<i64: 1, 32>}, {pipeline_mode = #tpu.pipeline_mode<synchronous>, transform_indices = @transform_11, window_bounds = array<i64: 1, 32>}, {pipeline_mode = #tpu.pipeline_mode<synchronous>, transform_indices = @transform_12, window_bounds = array<i64: 1, 32>}, {transform_indices = @transform_13, window_bounds = array<i64: 1, 8, 32>}]} {
    %c0 = arith.constant 0 : index
    %c0_0 = arith.constant 0 : index
    %c0_1 = arith.constant 0 : index
    %0 = vector.load %arg1[%c0, %c0_0, %c0_1] : memref<1x8x32xf32, #tpu.memory_space<vmem>>, vector<1x8x32xf32>
    %1 = vector.shape_cast %0 : vector<1x8x32xf32> to vector<8x32xf32>
    %2 = arith.truncf %1 : vector<8x32xf32> to vector<8x32xbf16>
    %c0_2 = arith.constant 0 : index
    %c0_3 = arith.constant 0 : index
    %3 = vector.load %arg2[%c0_2, %c0_3] : memref<32x96xbf16, #tpu.memory_space<vmem>>, vector<32x96xbf16>
    %cst = arith.constant dense<0.000000e+00> : vector<8x96xf32>
    %4 = tpu.matmul %2, %3, %cst {dimension_numbers = #tpu.dot_dimension_numbers<[1], [0], [0], [1], [0, 0, 1, 1], [], []>} : vector<8x32xbf16>, vector<32x96xbf16>, vector<8x96xf32> -> vector<8x96xf32>
    %c0_4 = arith.constant 0 : index
    %c0_5 = arith.constant 0 : index
    %5 = vector.load %arg3[%c0_4, %c0_5] : memref<1x96xf32, #tpu.memory_space<vmem>>, vector<1x96xf32>
    %6 = vector.broadcast %5 : vector<1x96xf32> to vector<8x96xf32>
    %7 = arith.addf %4, %6 : vector<8x96xf32>
    %8 = vector.extract_strided_slice %7 {offsets = [0, 0], sizes = [8, 32], strides = [1, 1]} : vector<8x96xf32> to vector<8x32xf32>
    %cst_6 = arith.constant 0.353553385 : f32
    %9 = vector.broadcast %cst_6 : f32 to vector<8x32xf32>
    %10 = arith.mulf %8, %9 : vector<8x32xf32>
    %11 = arith.truncf %10 : vector<8x32xf32> to vector<8x32xbf16>
    %12 = vector.extract_strided_slice %7 {offsets = [0, 32], sizes = [8, 32], strides = [1, 1]} : vector<8x96xf32> to vector<8x32xf32>
    %13 = arith.truncf %12 : vector<8x32xf32> to vector<8x32xbf16>
    %14 = vector.extract_strided_slice %7 {offsets = [0, 64], sizes = [8, 32], strides = [1, 1]} : vector<8x96xf32> to vector<8x32xf32>
    %15 = arith.truncf %14 : vector<8x32xf32> to vector<8x32xbf16>
    %cst_7 = arith.constant 0.000000e+00 : f32
    %16 = vector.broadcast %cst_7 : f32 to vector<8x32xf32>
    %17 = vector.extract_strided_slice %11 {offsets = [0, 0], sizes = [8, 8], strides = [1, 1]} : vector<8x32xbf16> to vector<8x8xbf16>
    %18 = vector.extract_strided_slice %13 {offsets = [0, 0], sizes = [8, 8], strides = [1, 1]} : vector<8x32xbf16> to vector<8x8xbf16>
    %cst_8 = arith.constant dense<0.000000e+00> : vector<8x8xf32>
    %19 = tpu.matmul %17, %18, %cst_8 {dimension_numbers = #tpu.dot_dimension_numbers<[1], [1], [0], [0], [0, 0, 1, 0], [], []>} : vector<8x8xbf16>, vector<8x8xbf16>, vector<8x8xf32> -> vector<8x8xf32>
    %cst_9 = arith.constant dense<0xFF800000> : vector<8xf32>
    %20 = vector.multi_reduction <maximumf>, %19, %cst_9 [1] : vector<8x8xf32> to vector<8xf32>
    %21 = vector.shape_cast %20 : vector<8xf32> to vector<8x1xf32>
    %22 = vector.broadcast %21 : vector<8x1xf32> to vector<8x8xf32>
    %23 = arith.subf %19, %22 : vector<8x8xf32>
    %24 = math.exp %23 : vector<8x8xf32>
    %cst_10 = arith.constant dense<0.000000e+00> : vector<8xf32>
    %25 = vector.multi_reduction <add>, %24, %cst_10 [1] : vector<8x8xf32> to vector<8xf32>
    %26 = vector.shape_cast %25 : vector<8xf32> to vector<8x1xf32>
    %27 = tpu.reciprocal %26 {approx = true} : vector<8x1xf32> -> vector<8x1xf32>
    %28 = vector.broadcast %27 : vector<8x1xf32> to vector<8x8xf32>
    %29 = arith.mulf %24, %28 : vector<8x8xf32>
    %30 = arith.truncf %29 : vector<8x8xf32> to vector<8x8xbf16>
    %31 = vector.extract_strided_slice %15 {offsets = [0, 0], sizes = [8, 8], strides = [1, 1]} : vector<8x32xbf16> to vector<8x8xbf16>
    %cst_11 = arith.constant dense<0.000000e+00> : vector<8x8xf32>
    %32 = tpu.matmul %30, %31, %cst_11 {dimension_numbers = #tpu.dot_dimension_numbers<[1], [0], [0], [1], [0, 0, 1, 1], [], []>} : vector<8x8xbf16>, vector<8x8xbf16>, vector<8x8xf32> -> vector<8x8xf32>
    %33 = arith.truncf %32 : vector<8x8xf32> to vector<8x8xbf16>
    %c0_12 = arith.constant 0 : index
    %c0_13 = arith.constant 0 : index
    %34 = vector.load %arg4[%c0_12, %c0_13] : memref<32x32xbf16, #tpu.memory_space<vmem>>, vector<8x32xbf16>
    %cst_14 = arith.constant dense<0.000000e+00> : vector<8x32xf32>
    %35 = tpu.matmul %33, %34, %cst_14 {dimension_numbers = #tpu.dot_dimension_numbers<[1], [0], [0], [1], [0, 0, 1, 1], [], []>} : vector<8x8xbf16>, vector<8x32xbf16>, vector<8x32xf32> -> vector<8x32xf32>
    %36 = arith.addf %16, %35 : vector<8x32xf32>
    %37 = vector.extract_strided_slice %11 {offsets = [0, 8], sizes = [8, 8], strides = [1, 1]} : vector<8x32xbf16> to vector<8x8xbf16>
    %38 = vector.extract_strided_slice %13 {offsets = [0, 8], sizes = [8, 8], strides = [1, 1]} : vector<8x32xbf16> to vector<8x8xbf16>
    %cst_15 = arith.constant dense<0.000000e+00> : vector<8x8xf32>
    %39 = tpu.matmul %37, %38, %cst_15 {dimension_numbers = #tpu.dot_dimension_numbers<[1], [1], [0], [0], [0, 0, 1, 0], [], []>} : vector<8x8xbf16>, vector<8x8xbf16>, vector<8x8xf32> -> vector<8x8xf32>
    %cst_16 = arith.constant dense<0xFF800000> : vector<8xf32>
    %40 = vector.multi_reduction <maximumf>, %39, %cst_16 [1] : vector<8x8xf32> to vector<8xf32>
    %41 = vector.shape_cast %40 : vector<8xf32> to vector<8x1xf32>
    %42 = vector.broadcast %41 : vector<8x1xf32> to vector<8x8xf32>
    %43 = arith.subf %39, %42 : vector<8x8xf32>
    %44 = math.exp %43 : vector<8x8xf32>
    %cst_17 = arith.constant dense<0.000000e+00> : vector<8xf32>
    %45 = vector.multi_reduction <add>, %44, %cst_17 [1] : vector<8x8xf32> to vector<8xf32>
    %46 = vector.shape_cast %45 : vector<8xf32> to vector<8x1xf32>
    %47 = tpu.reciprocal %46 {approx = true} : vector<8x1xf32> -> vector<8x1xf32>
    %48 = vector.broadcast %47 : vector<8x1xf32> to vector<8x8xf32>
    %49 = arith.mulf %44, %48 : vector<8x8xf32>
    %50 = arith.truncf %49 : vector<8x8xf32> to vector<8x8xbf16>
    %51 = vector.extract_strided_slice %15 {offsets = [0, 8], sizes = [8, 8], strides = [1, 1]} : vector<8x32xbf16> to vector<8x8xbf16>
    %cst_18 = arith.constant dense<0.000000e+00> : vector<8x8xf32>
    %52 = tpu.matmul %50, %51, %cst_18 {dimension_numbers = #tpu.dot_dimension_numbers<[1], [0], [0], [1], [0, 0, 1, 1], [], []>} : vector<8x8xbf16>, vector<8x8xbf16>, vector<8x8xf32> -> vector<8x8xf32>
    %53 = arith.truncf %52 : vector<8x8xf32> to vector<8x8xbf16>
    %c8 = arith.constant 8 : index
    %c0_19 = arith.constant 0 : index
    %54 = vector.load %arg4[%c8, %c0_19] : memref<32x32xbf16, #tpu.memory_space<vmem>>, vector<8x32xbf16>
    %cst_20 = arith.constant dense<0.000000e+00> : vector<8x32xf32>
    %55 = tpu.matmul %53, %54, %cst_20 {dimension_numbers = #tpu.dot_dimension_numbers<[1], [0], [0], [1], [0, 0, 1, 1], [], []>} : vector<8x8xbf16>, vector<8x32xbf16>, vector<8x32xf32> -> vector<8x32xf32>
    %56 = arith.addf %36, %55 : vector<8x32xf32>
    %57 = vector.extract_strided_slice %11 {offsets = [0, 16], sizes = [8, 8], strides = [1, 1]} : vector<8x32xbf16> to vector<8x8xbf16>
    %58 = vector.extract_strided_slice %13 {offsets = [0, 16], sizes = [8, 8], strides = [1, 1]} : vector<8x32xbf16> to vector<8x8xbf16>
    %cst_21 = arith.constant dense<0.000000e+00> : vector<8x8xf32>
    %59 = tpu.matmul %57, %58, %cst_21 {dimension_numbers = #tpu.dot_dimension_numbers<[1], [1], [0], [0], [0, 0, 1, 0], [], []>} : vector<8x8xbf16>, vector<8x8xbf16>, vector<8x8xf32> -> vector<8x8xf32>
    %cst_22 = arith.constant dense<0xFF800000> : vector<8xf32>
    %60 = vector.multi_reduction <maximumf>, %59, %cst_22 [1] : vector<8x8xf32> to vector<8xf32>
    %61 = vector.shape_cast %60 : vector<8xf32> to vector<8x1xf32>
    %62 = vector.broadcast %61 : vector<8x1xf32> to vector<8x8xf32>
    %63 = arith.subf %59, %62 : vector<8x8xf32>
    %64 = math.exp %63 : vector<8x8xf32>
    %cst_23 = arith.constant dense<0.000000e+00> : vector<8xf32>
    %65 = vector.multi_reduction <add>, %64, %cst_23 [1] : vector<8x8xf32> to vector<8xf32>
    %66 = vector.shape_cast %65 : vector<8xf32> to vector<8x1xf32>
    %67 = tpu.reciprocal %66 {approx = true} : vector<8x1xf32> -> vector<8x1xf32>
    %68 = vector.broadcast %67 : vector<8x1xf32> to vector<8x8xf32>
    %69 = arith.mulf %64, %68 : vector<8x8xf32>
    %70 = arith.truncf %69 : vector<8x8xf32> to vector<8x8xbf16>
    %71 = vector.extract_strided_slice %15 {offsets = [0, 16], sizes = [8, 8], strides = [1, 1]} : vector<8x32xbf16> to vector<8x8xbf16>
    %cst_24 = arith.constant dense<0.000000e+00> : vector<8x8xf32>
    %72 = tpu.matmul %70, %71, %cst_24 {dimension_numbers = #tpu.dot_dimension_numbers<[1], [0], [0], [1], [0, 0, 1, 1], [], []>} : vector<8x8xbf16>, vector<8x8xbf16>, vector<8x8xf32> -> vector<8x8xf32>
    %73 = arith.truncf %72 : vector<8x8xf32> to vector<8x8xbf16>
    %c16 = arith.constant 16 : index
    %c0_25 = arith.constant 0 : index
    %74 = vector.load %arg4[%c16, %c0_25] : memref<32x32xbf16, #tpu.memory_space<vmem>>, vector<8x32xbf16>
    %cst_26 = arith.constant dense<0.000000e+00> : vector<8x32xf32>
    %75 = tpu.matmul %73, %74, %cst_26 {dimension_numbers = #tpu.dot_dimension_numbers<[1], [0], [0], [1], [0, 0, 1, 1], [], []>} : vector<8x8xbf16>, vector<8x32xbf16>, vector<8x32xf32> -> vector<8x32xf32>
    %76 = arith.addf %56, %75 : vector<8x32xf32>
    %77 = vector.extract_strided_slice %11 {offsets = [0, 24], sizes = [8, 8], strides = [1, 1]} : vector<8x32xbf16> to vector<8x8xbf16>
    %78 = vector.extract_strided_slice %13 {offsets = [0, 24], sizes = [8, 8], strides = [1, 1]} : vector<8x32xbf16> to vector<8x8xbf16>
    %cst_27 = arith.constant dense<0.000000e+00> : vector<8x8xf32>
    %79 = tpu.matmul %77, %78, %cst_27 {dimension_numbers = #tpu.dot_dimension_numbers<[1], [1], [0], [0], [0, 0, 1, 0], [], []>} : vector<8x8xbf16>, vector<8x8xbf16>, vector<8x8xf32> -> vector<8x8xf32>
    %cst_28 = arith.constant dense<0xFF800000> : vector<8xf32>
    %80 = vector.multi_reduction <maximumf>, %79, %cst_28 [1] : vector<8x8xf32> to vector<8xf32>
    %81 = vector.shape_cast %80 : vector<8xf32> to vector<8x1xf32>
    %82 = vector.broadcast %81 : vector<8x1xf32> to vector<8x8xf32>
    %83 = arith.subf %79, %82 : vector<8x8xf32>
    %84 = math.exp %83 : vector<8x8xf32>
    %cst_29 = arith.constant dense<0.000000e+00> : vector<8xf32>
    %85 = vector.multi_reduction <add>, %84, %cst_29 [1] : vector<8x8xf32> to vector<8xf32>
    %86 = vector.shape_cast %85 : vector<8xf32> to vector<8x1xf32>
    %87 = tpu.reciprocal %86 {approx = true} : vector<8x1xf32> -> vector<8x1xf32>
    %88 = vector.broadcast %87 : vector<8x1xf32> to vector<8x8xf32>
    %89 = arith.mulf %84, %88 : vector<8x8xf32>
    %90 = arith.truncf %89 : vector<8x8xf32> to vector<8x8xbf16>
    %91 = vector.extract_strided_slice %15 {offsets = [0, 24], sizes = [8, 8], strides = [1, 1]} : vector<8x32xbf16> to vector<8x8xbf16>
    %cst_30 = arith.constant dense<0.000000e+00> : vector<8x8xf32>
    %92 = tpu.matmul %90, %91, %cst_30 {dimension_numbers = #tpu.dot_dimension_numbers<[1], [0], [0], [1], [0, 0, 1, 1], [], []>} : vector<8x8xbf16>, vector<8x8xbf16>, vector<8x8xf32> -> vector<8x8xf32>
    %93 = arith.truncf %92 : vector<8x8xf32> to vector<8x8xbf16>
    %c24 = arith.constant 24 : index
    %c0_31 = arith.constant 0 : index
    %94 = vector.load %arg4[%c24, %c0_31] : memref<32x32xbf16, #tpu.memory_space<vmem>>, vector<8x32xbf16>
    %cst_32 = arith.constant dense<0.000000e+00> : vector<8x32xf32>
    %95 = tpu.matmul %93, %94, %cst_32 {dimension_numbers = #tpu.dot_dimension_numbers<[1], [0], [0], [1], [0, 0, 1, 1], [], []>} : vector<8x8xbf16>, vector<8x32xbf16>, vector<8x32xf32> -> vector<8x32xf32>
    %96 = arith.addf %76, %95 : vector<8x32xf32>
    %c0_33 = arith.constant 0 : index
    %c0_34 = arith.constant 0 : index
    %97 = vector.load %arg5[%c0_33, %c0_34] : memref<1x32xf32, #tpu.memory_space<vmem>>, vector<1x32xf32>
    %98 = vector.broadcast %97 : vector<1x32xf32> to vector<8x32xf32>
    %99 = arith.addf %96, %98 : vector<8x32xf32>
    %100 = arith.addf %1, %99 : vector<8x32xf32>
    %c0_35 = arith.constant 0 : index
    %c0_36 = arith.constant 0 : index
    %101 = vector.load %arg6[%c0_35, %c0_36] : memref<1x32xf32, #tpu.memory_space<vmem>>, vector<1x32xf32>
    %c0_37 = arith.constant 0 : index
    %c0_38 = arith.constant 0 : index
    %102 = vector.load %arg7[%c0_37, %c0_38] : memref<1x32xf32, #tpu.memory_space<vmem>>, vector<1x32xf32>
    %cst_39 = arith.constant dense<0.000000e+00> : vector<8xf32>
    %103 = vector.multi_reduction <add>, %100, %cst_39 [1] : vector<8x32xf32> to vector<8xf32>
    %104 = vector.shape_cast %103 : vector<8xf32> to vector<8x1xf32>
    %cst_40 = arith.constant 3.125000e-02 : f32
    %105 = vector.broadcast %cst_40 : f32 to vector<8x1xf32>
    %106 = arith.mulf %104, %105 : vector<8x1xf32>
    %107 = vector.broadcast %106 : vector<8x1xf32> to vector<8x32xf32>
    %108 = arith.subf %100, %107 : vector<8x32xf32>
    %109 = arith.mulf %108, %108 : vector<8x32xf32>
    %cst_41 = arith.constant dense<0.000000e+00> : vector<8xf32>
    %110 = vector.multi_reduction <add>, %109, %cst_41 [1] : vector<8x32xf32> to vector<8xf32>
    %111 = vector.shape_cast %110 : vector<8xf32> to vector<8x1xf32>
    %cst_42 = arith.constant 3.125000e-02 : f32
    %112 = vector.broadcast %cst_42 : f32 to vector<8x1xf32>
    %113 = arith.mulf %111, %112 : vector<8x1xf32>
    %cst_43 = arith.constant 9.99999974E-6 : f32
    %114 = vector.broadcast %cst_43 : f32 to vector<8x1xf32>
    %115 = arith.addf %113, %114 : vector<8x1xf32>
    %116 = math.rsqrt %115 : vector<8x1xf32>
    %117 = vector.broadcast %116 : vector<8x1xf32> to vector<8x32xf32>
    %118 = arith.mulf %108, %117 : vector<8x32xf32>
    %119 = vector.broadcast %101 : vector<1x32xf32> to vector<8x32xf32>
    %120 = arith.mulf %118, %119 : vector<8x32xf32>
    %121 = vector.broadcast %102 : vector<1x32xf32> to vector<8x32xf32>
    %122 = arith.addf %120, %121 : vector<8x32xf32>
    %123 = arith.truncf %122 : vector<8x32xf32> to vector<8x32xbf16>
    %c0_44 = arith.constant 0 : index
    %c0_45 = arith.constant 0 : index
    %124 = vector.load %arg8[%c0_44, %c0_45] : memref<32x64xbf16, #tpu.memory_space<vmem>>, vector<32x64xbf16>
    %cst_46 = arith.constant dense<0.000000e+00> : vector<8x64xf32>
    %125 = tpu.matmul %123, %124, %cst_46 {dimension_numbers = #tpu.dot_dimension_numbers<[1], [0], [0], [1], [0, 0, 1, 1], [], []>} : vector<8x32xbf16>, vector<32x64xbf16>, vector<8x64xf32> -> vector<8x64xf32>
    %c0_47 = arith.constant 0 : index
    %c0_48 = arith.constant 0 : index
    %126 = vector.load %arg9[%c0_47, %c0_48] : memref<1x64xf32, #tpu.memory_space<vmem>>, vector<1x64xf32>
    %127 = vector.broadcast %126 : vector<1x64xf32> to vector<8x64xf32>
    %128 = arith.addf %125, %127 : vector<8x64xf32>
    %cst_49 = arith.constant 0.000000e+00 : f32
    %129 = vector.broadcast %cst_49 : f32 to vector<8x64xf32>
    %130 = arith.maximumf %128, %129 : vector<8x64xf32>
    %131 = arith.truncf %130 : vector<8x64xf32> to vector<8x64xbf16>
    %c0_50 = arith.constant 0 : index
    %c0_51 = arith.constant 0 : index
    %132 = vector.load %arg10[%c0_50, %c0_51] : memref<64x32xbf16, #tpu.memory_space<vmem>>, vector<64x32xbf16>
    %cst_52 = arith.constant dense<0.000000e+00> : vector<8x32xf32>
    %133 = tpu.matmul %131, %132, %cst_52 {dimension_numbers = #tpu.dot_dimension_numbers<[1], [0], [0], [1], [0, 0, 1, 1], [], []>} : vector<8x64xbf16>, vector<64x32xbf16>, vector<8x32xf32> -> vector<8x32xf32>
    %c0_53 = arith.constant 0 : index
    %c0_54 = arith.constant 0 : index
    %134 = vector.load %arg11[%c0_53, %c0_54] : memref<1x32xf32, #tpu.memory_space<vmem>>, vector<1x32xf32>
    %135 = vector.broadcast %134 : vector<1x32xf32> to vector<8x32xf32>
    %136 = arith.addf %133, %135 : vector<8x32xf32>
    %137 = arith.addf %122, %136 : vector<8x32xf32>
    %c0_55 = arith.constant 0 : index
    %c0_56 = arith.constant 0 : index
    %138 = vector.load %arg12[%c0_55, %c0_56] : memref<1x32xf32, #tpu.memory_space<vmem>>, vector<1x32xf32>
    %c0_57 = arith.constant 0 : index
    %c0_58 = arith.constant 0 : index
    %139 = vector.load %arg13[%c0_57, %c0_58] : memref<1x32xf32, #tpu.memory_space<vmem>>, vector<1x32xf32>
    %cst_59 = arith.constant dense<0.000000e+00> : vector<8xf32>
    %140 = vector.multi_reduction <add>, %137, %cst_59 [1] : vector<8x32xf32> to vector<8xf32>
    %141 = vector.shape_cast %140 : vector<8xf32> to vector<8x1xf32>
    %cst_60 = arith.constant 3.125000e-02 : f32
    %142 = vector.broadcast %cst_60 : f32 to vector<8x1xf32>
    %143 = arith.mulf %141, %142 : vector<8x1xf32>
    %144 = vector.broadcast %143 : vector<8x1xf32> to vector<8x32xf32>
    %145 = arith.subf %137, %144 : vector<8x32xf32>
    %146 = arith.mulf %145, %145 : vector<8x32xf32>
    %cst_61 = arith.constant dense<0.000000e+00> : vector<8xf32>
    %147 = vector.multi_reduction <add>, %146, %cst_61 [1] : vector<8x32xf32> to vector<8xf32>
    %148 = vector.shape_cast %147 : vector<8xf32> to vector<8x1xf32>
    %cst_62 = arith.constant 3.125000e-02 : f32
    %149 = vector.broadcast %cst_62 : f32 to vector<8x1xf32>
    %150 = arith.mulf %148, %149 : vector<8x1xf32>
    %cst_63 = arith.constant 9.99999974E-6 : f32
    %151 = vector.broadcast %cst_63 : f32 to vector<8x1xf32>
    %152 = arith.addf %150, %151 : vector<8x1xf32>
    %153 = math.rsqrt %152 : vector<8x1xf32>
    %154 = vector.broadcast %153 : vector<8x1xf32> to vector<8x32xf32>
    %155 = arith.mulf %145, %154 : vector<8x32xf32>
    %156 = vector.broadcast %138 : vector<1x32xf32> to vector<8x32xf32>
    %157 = arith.mulf %155, %156 : vector<8x32xf32>
    %158 = vector.broadcast %139 : vector<1x32xf32> to vector<8x32xf32>
    %159 = arith.addf %157, %158 : vector<8x32xf32>
    %c0_64 = arith.constant 0 : index
    %c0_65 = arith.constant 0 : index
    %c0_66 = arith.constant 0 : index
    %160 = vector.load %arg14[%c0_64, %c0_65, %c0_66] : memref<1x8x32xf32, #tpu.memory_space<vmem>>, vector<1x8x32xf32>
    %161 = vector.shape_cast %160 : vector<1x8x32xf32> to vector<8x32xf32>
    %162 = vector.shape_cast %159 : vector<8x32xf32> to vector<1x8x32xf32>
    tpu.vector_store %arg14[%c0_64, %c0_65, %c0_66], %162 {strides = array<i32>} : memref<1x8x32xf32, #tpu.memory_space<vmem>>, vector<1x8x32xf32>,
    return
  }
  func.func @transform_0(%arg0: i32) -> (i32, i32, i32) {
    %c0_i32 = arith.constant 0 : i32
    %c0_i32_0 = arith.constant 0 : i32
    %c0_i32_1 = arith.constant 0 : i32
    return %arg0, %c0_i32, %c0_i32_0 : i32, i32, i32
  }
  func.func @transform_1(%arg0: i32) -> (i32, i32) {
    %c0_i32 = arith.constant 0 : i32
    %c0_i32_0 = arith.constant 0 : i32
    %c0_i32_1 = arith.constant 0 : i32
    return %c0_i32, %c0_i32_0 : i32, i32
  }
  func.func @transform_2(%arg0: i32) -> (i32, i32) {
    %c0_i32 = arith.constant 0 : i32
    %c0_i32_0 = arith.constant 0 : i32
    %c0_i32_1 = arith.constant 0 : i32
    return %c0_i32, %c0_i32_0 : i32, i32
  }
  func.func @transform_3(%arg0: i32) -> (i32, i32) {
    %c0_i32 = arith.constant 0 : i32
    %c0_i32_0 = arith.constant 0 : i32
    %c0_i32_1 = arith.constant 0 : i32
    return %c0_i32, %c0_i32_0 : i32, i32
  }
  func.func @transform_4(%arg0: i32) -> (i32, i32) {
    %c0_i32 = arith.constant 0 : i32
    %c0_i32_0 = arith.constant 0 : i32
    %c0_i32_1 = arith.constant 0 : i32
    return %c0_i32, %c0_i32_0 : i32, i32
  }
  func.func @transform_5(%arg0: i32) -> (i32, i32) {
    %c0_i32 = arith.constant 0 : i32
    %c0_i32_0 = arith.constant 0 : i32
    %c0_i32_1 = arith.constant 0 : i32
    return %c0_i32, %c0_i32_0 : i32, i32
  }
  func.func @transform_6(%arg0: i32) -> (i32, i32) {
    %c0_i32 = arith.constant 0 : i32
    %c0_i32_0 = arith.constant 0 : i32
    %c0_i32_1 = arith.constant 0 : i32
    return %c0_i32, %c0_i32_0 : i32, i32
  }
  func.func @transform_7(%arg0: i32) -> (i32, i32) {
    %c0_i32 = arith.constant 0 : i32
    %c0_i32_0 = arith.constant 0 : i32
    %c0_i32_1 = arith.constant 0 : i32
    return %c0_i32, %c0_i32_0 : i32, i32
  }
  func.func @transform_8(%arg0: i32) -> (i32, i32) {
    %c0_i32 = arith.constant 0 : i32
    %c0_i32_0 = arith.constant 0 : i32
    %c0_i32_1 = arith.constant 0 : i32
    return %c0_i32, %c0_i32_0 : i32, i32
  }
  func.func @transform_9(%arg0: i32) -> (i32, i32) {
    %c0_i32 = arith.constant 0 : i32
    %c0_i32_0 = arith.constant 0 : i32
    %c0_i32_1 = arith.constant 0 : i32
    return %c0_i32, %c0_i32_0 : i32, i32
  }
  func.func @transform_10(%arg0: i32) -> (i32, i32) {
    %c0_i32 = arith.constant 0 : i32
    %c0_i32_0 = arith.constant 0 : i32
    %c0_i32_1 = arith.constant 0 : i32
    return %c0_i32, %c0_i32_0 : i32, i32
  }
  func.func @transform_11(%arg0: i32) -> (i32, i32) {
    %c0_i32 = arith.constant 0 : i32
    %c0_i32_0 = arith.constant 0 : i32
    %c0_i32_1 = arith.constant 0 : i32
    return %c0_i32, %c0_i32_0 : i32, i32
  }
  func.func @transform_12(%arg0: i32) -> (i32, i32) {
    %c0_i32 = arith.constant 0 : i32
    %c0_i32_0 = arith.constant 0 : i32
    %c0_i32_1 = arith.constant 0 : i32
    return %c0_i32, %c0_i32_0 : i32, i32
  }
  func.func @transform_13(%arg0: i32) -> (i32, i32, i32) {
    %c0_i32 = arith.constant 0 : i32
    %c0_i32_0 = arith.constant 0 : i32
    %c0_i32_1 = arith.constant 0 : i32
    return %arg0, %c0_i32, %c0_i32_0 : i32, i32, i32
  }
}

</mosaic_0001>

<llo_original>
// kernel: tpu_custom_call.1
$region0: #{tpu_custom_call.1}
  #allocation0 [shape = 'u32[]', space=smem, size = 0x4, offset = 0x4, fixed_abs, tag = 'smem constant byte address 0x4 - core index']
  #allocation1 [shape = 'u32[72,128]{1,0:T(1,128)}', space=vmem, size = 0x9000, scoped, tag = 'internal scratch']
  %s0 = inlined_call_operand.vmem [shape: f32[2,8,32], index: 0, kind: input, shape index: {}]
  %s1 = inlined_call_operand.vmem [shape: bf16[32,96], index: 1, kind: input, shape index: {}]
  %s2 = inlined_call_operand.vmem [shape: f32[1,96], index: 2, kind: input, shape index: {}]
  %s3 = inlined_call_operand.vmem [shape: bf16[32,32], index: 3, kind: input, shape index: {}]
  %s4 = inlined_call_operand.vmem [shape: f32[1,32], index: 4, kind: input, shape index: {}]
  %s5 = inlined_call_operand.vmem [shape: f32[1,32], index: 5, kind: input, shape index: {}]
  %s6 = inlined_call_operand.vmem [shape: f32[1,32], index: 6, kind: input, shape index: {}]
  %s7 = inlined_call_operand.hbm [shape: bf16[32,64], index: 7, kind: input, shape index: {}]
  %s8 = inlined_call_operand.vmem [shape: f32[1,64], index: 8, kind: input, shape index: {}]
  %s9 = inlined_call_operand.vmem [shape: bf16[64,32], index: 9, kind: input, shape index: {}]
  %s10 = inlined_call_operand.vmem [shape: f32[1,32], index: 10, kind: input, shape index: {}]
  %s11 = inlined_call_operand.vmem [shape: f32[1,32], index: 11, kind: input, shape index: {}]
  %s12 = inlined_call_operand.vmem [shape: f32[1,32], index: 12, kind: input, shape index: {}]
  %s13 = inlined_call_operand.hbm [shape: f32[2,8,32], index: 13, kind: output, shape index: {}]
  %s14 = sld [smem:[#allocation0]]
  $region89: #{tpu_custom_call.1} parent=0
    _
  %s16 = ssub.s32 1, %s14
  %s17 = scalar_select 0, %s16, %s14
  $region1: #{tpu_custom_call.1} parent=0
    #allocation2 [shape = 'u8[8192]{0}', space=vmem, size = 0x2000, scoped, tag = 'input window, operand 7, single buffered']
    #allocation3 [shape = 's32[2]{0}', space=sflag, size = 0x8, scoped, tag = 'scoped memory for tpu_custom_call.1']
    #allocation4 [shape = 's32[2]{0}', space=sflag, size = 0x8, scoped, tag = 'scoped memory for tpu_custom_call.1']
    #allocation5 [shape = 'u8[8192]{0}', space=vmem, size = 0x2000, scoped, tag = 'output window, operand 0']
    %18 = vsyncpa [#allocation3], 0
    %19 = vsyncpa [#allocation4], 0
    %s20 = scalar_lea.sflag [#allocation4], 1
    %21 = vsyncpa %s20, 0
    loop: start=0, step=1, limit=4
    $region2: #{tpu_custom_call.1} parent=1 // loop_pre_header
      _
    $region3: #{tpu_custom_call.1} parent=1 // loop_header
      %s23 = sphi 0, %s27
      %p24 = scmp.ge.s32.totalorder %s23, 4
      %s33 = sphi 0, %s35
      %s36 = sphi 0, %s33
      %s37 = sphi 0, %s36
      %s53 = sphi 0, %s37
      %s57 = sphi 0, %s57
      %s59 = sphi 0, %s57
      %s60 = sphi 0, %s59
      %s74 = sphi 0, %s60
      %s78 = sphi 0, %s78
      %s80 = sphi 0, %s78
      %s81 = sphi 0, %s80
      %s95 = sphi 0, %s81
      %s99 = sphi 0, %s99
      %s101 = sphi 0, %s99
      %s102 = sphi 0, %s101
      %s116 = sphi 0, %s102
      %s120 = sphi 0, %s120
      %s122 = sphi 0, %s120
      %s123 = sphi 0, %s122
      %s137 = sphi 0, %s123
      %s141 = sphi 0, %s141
      %s143 = sphi 0, %s141
      %s144 = sphi 0, %s143
      %s158 = sphi 0, %s144
      %s162 = sphi 0, %s162
      %s164 = sphi 0, %s162
      %s165 = sphi 0, %s164
      %s179 = sphi 0, %s165
      %s183 = sphi 0, %s183
      %s185 = sphi 0, %s183
      %s186 = sphi 0, %s185
      %s200 = sphi 0, %s186
      %s204 = sphi 0, %s204
      %s206 = sphi 0, %s204
      %s207 = sphi 0, %s206
      %s221 = sphi 0, %s207
      %s225 = sphi 0, %s225
      %s227 = sphi 0, %s225
      %s228 = sphi 0, %s227
      %s242 = sphi 0, %s228
      %s246 = sphi 0, %s246
      %s248 = sphi 0, %s246
      %s249 = sphi 0, %s248
      %s263 = sphi 0, %s249
      %s267 = sphi 0, %s267
      %s269 = sphi 0, %s267
      %s270 = sphi 0, %s269
      %s284 = sphi 0, %s270
      %s288 = sphi 0, %s288
      %s290 = sphi 0, %s288
      %s291 = sphi 0, %s290
      %s305 = sphi 0, %s291
      %s311 = sphi 0, %s313
      %s314 = sphi 0, %s311
      %s315 = sphi 0, %s314
      %s331 = sphi 0, %s315
    $region4: #{tpu_custom_call.1} parent=1 // loop_header_branch
      %26 = sbr.rel (%p24) target = $region8
    $region5: #{tpu_custom_call.1} parent=1 // loop_body
      %s28 = ssub.s32 %s23, 1
      %s29 = ssub.s32 %s23, 2
      %s30 = sadd.s32 %s23, 1
      %s31 = ssub.s32 %s23, %s30
      %p32 = scmp.eq.s32.totalorder %s31, 0
      %s34 = sadd.s32 %s33, 1
      %s35 = scalar_select %p32, %s33, %s34
      %p38 = pneg %p32
      %p39 = scmp.eq.s32.totalorder %s23, 1
      %p40 = por %p38, %p39
      %p41 = scmp.ne.s32.totalorder %s33, %s36
      %p42 = scmp.eq.s32.totalorder %s23, 0
      %p43 = por %p41, %p42
      %p44 = scmp.ne.s32.totalorder %s33, %s36
      %p45 = scmp.eq.s32.totalorder %s28, 1
      %p46 = por %p44, %p45
      %p47 = scmp.ne.s32.totalorder %s36, %s37
      %p48 = scmp.eq.s32.totalorder %s28, 0
      %p49 = por %p47, %p48
      %p50 = scmp.ne.s32.totalorder %s36, %s37
      %p51 = scmp.eq.s32.totalorder %s29, 1
      %p52 = por %p50, %p51
      %p54 = scmp.ne.s32.totalorder %s37, %s53
      %p55 = scmp.eq.s32.totalorder %s29, 0
      %p56 = por %p54, %p55
      %s58 = sadd.s32 %s57, 1
      %p61 = scmp.eq.s32.totalorder %s23, 1
      %p62 = scmp.ne.s32.totalorder %s57, %s59
      %p63 = scmp.eq.s32.totalorder %s23, 0
      %p64 = por %p62, %p63
      %p65 = scmp.ne.s32.totalorder %s57, %s59
      %p66 = scmp.eq.s32.totalorder %s28, 1
      %p67 = por %p65, %p66
      %p68 = scmp.ne.s32.totalorder %s59, %s60
      %p69 = scmp.eq.s32.totalorder %s28, 0
      %p70 = por %p68, %p69
      %p71 = scmp.ne.s32.totalorder %s59, %s60
      %p72 = scmp.eq.s32.totalorder %s29, 1
      %p73 = por %p71, %p72
      %p75 = scmp.ne.s32.totalorder %s60, %s74
      %p76 = scmp.eq.s32.totalorder %s29, 0
      %p77 = por %p75, %p76
      %s79 = sadd.s32 %s78, 1
      %p82 = scmp.eq.s32.totalorder %s23, 1
      %p83 = scmp.ne.s32.totalorder %s78, %s80
      %p84 = scmp.eq.s32.totalorder %s23, 0
      %p85 = por %p83, %p84
      %p86 = scmp.ne.s32.totalorder %s78, %s80
      %p87 = scmp.eq.s32.totalorder %s28, 1
      %p88 = por %p86, %p87
      %p89 = scmp.ne.s32.totalorder %s80, %s81
      %p90 = scmp.eq.s32.totalorder %s28, 0
      %p91 = por %p89, %p90
      %p92 = scmp.ne.s32.totalorder %s80, %s81
      %p93 = scmp.eq.s32.totalorder %s29, 1
      %p94 = por %p92, %p93
      %p96 = scmp.ne.s32.totalorder %s81, %s95
      %p97 = scmp.eq.s32.totalorder %s29, 0
      %p98 = por %p96, %p97
      %s100 = sadd.s32 %s99, 1
      %p103 = scmp.eq.s32.totalorder %s23, 1
      %p104 = scmp.ne.s32.totalorder %s99, %s101
      %p105 = scmp.eq.s32.totalorder %s23, 0
      %p106 = por %p104, %p105
      %p107 = scmp.ne.s32.totalorder %s99, %s101
      %p108 = scmp.eq.s32.totalorder %s28, 1
      %p109 = por %p107, %p108
      %p110 = scmp.ne.s32.totalorder %s101, %s102
      %p111 = scmp.eq.s32.totalorder %s28, 0
      %p112 = por %p110, %p111
      %p113 = scmp.ne.s32.totalorder %s101, %s102
      %p114 = scmp.eq.s32.totalorder %s29, 1
      %p115 = por %p113, %p114
      %p117 = scmp.ne.s32.totalorder %s102, %s116
      %p118 = scmp.eq.s32.totalorder %s29, 0
      %p119 = por %p117, %p118
      %s121 = sadd.s32 %s120, 1
      %p124 = scmp.eq.s32.totalorder %s23, 1
      %p125 = scmp.ne.s32.totalorder %s120, %s122
      %p126 = scmp.eq.s32.totalorder %s23, 0
      %p127 = por %p125, %p126
      %p128 = scmp.ne.s32.totalorder %s120, %s122
      %p129 = scmp.eq.s32.totalorder %s28, 1
      %p130 = por %p128, %p129
      %p131 = scmp.ne.s32.totalorder %s122, %s123
      %p132 = scmp.eq.s32.totalorder %s28, 0
      %p133 = por %p131, %p132
      %p134 = scmp.ne.s32.totalorder %s122, %s123
      %p135 = scmp.eq.s32.totalorder %s29, 1
      %p136 = por %p134, %p135
      %p138 = scmp.ne.s32.totalorder %s123, %s137
      %p139 = scmp.eq.s32.totalorder %s29, 0
      %p140 = por %p138, %p139
      %s142 = sadd.s32 %s141, 1
      %p145 = scmp.eq.s32.totalorder %s23, 1
      %p146 = scmp.ne.s32.totalorder %s141, %s143
      %p147 = scmp.eq.s32.totalorder %s23, 0
      %p148 = por %p146, %p147
      %p149 = scmp.ne.s32.totalorder %s141, %s143
      %p150 = scmp.eq.s32.totalorder %s28, 1
      %p151 = por %p149, %p150
      %p152 = scmp.ne.s32.totalorder %s143, %s144
      %p153 = scmp.eq.s32.totalorder %s28, 0
      %p154 = por %p152, %p153
      %p155 = scmp.ne.s32.totalorder %s143, %s144
      %p156 = scmp.eq.s32.totalorder %s29, 1
      %p157 = por %p155, %p156
      %p159 = scmp.ne.s32.totalorder %s144, %s158
      %p160 = scmp.eq.s32.totalorder %s29, 0
      %p161 = por %p159, %p160
      %s163 = sadd.s32 %s162, 1
      %p166 = scmp.eq.s32.totalorder %s23, 1
      %p167 = scmp.ne.s32.totalorder %s162, %s164
      %p168 = scmp.eq.s32.totalorder %s23, 0
      %p169 = por %p167, %p168
      %p170 = scmp.ne.s32.totalorder %s162, %s164
      %p171 = scmp.eq.s32.totalorder %s28, 1
      %p172 = por %p170, %p171
      %p173 = scmp.ne.s32.totalorder %s164, %s165
      %p174 = scmp.eq.s32.totalorder %s28, 0
      %p175 = por %p173, %p174
      %p176 = scmp.ne.s32.totalorder %s164, %s165
      %p177 = scmp.eq.s32.totalorder %s29, 1
      %p178 = por %p176, %p177
      %p180 = scmp.ne.s32.totalorder %s165, %s179
      %p181 = scmp.eq.s32.totalorder %s29, 0
      %p182 = por %p180, %p181
      %s184 = sadd.s32 %s183, 1
      %p187 = scmp.eq.s32.totalorder %s23, 1
      %p188 = scmp.ne.s32.totalorder %s183, %s185
      %p189 = scmp.eq.s32.totalorder %s23, 0
      %p190 = por %p188, %p189
      %p191 = scmp.ne.s32.totalorder %s183, %s185
      %p192 = scmp.eq.s32.totalorder %s28, 1
      %p193 = por %p191, %p192
      %p194 = scmp.ne.s32.totalorder %s185, %s186
      %p195 = scmp.eq.s32.totalorder %s28, 0
      %p196 = por %p194, %p195
      %p197 = scmp.ne.s32.totalorder %s185, %s186
      %p198 = scmp.eq.s32.totalorder %s29, 1
      %p199 = por %p197, %p198
      %p201 = scmp.ne.s32.totalorder %s186, %s200
      %p202 = scmp.eq.s32.totalorder %s29, 0
      %p203 = por %p201, %p202
      %s205 = sadd.s32 %s204, 1
      %p208 = scmp.eq.s32.totalorder %s23, 1
      %p209 = scmp.ne.s32.totalorder %s204, %s206
      %p210 = scmp.eq.s32.totalorder %s23, 0
      %p211 = por %p209, %p210
      %p212 = scmp.ne.s32.totalorder %s204, %s206
      %p213 = scmp.eq.s32.totalorder %s28, 1
      %p214 = por %p212, %p213
      %p215 = scmp.ne.s32.totalorder %s206, %s207
      %p216 = scmp.eq.s32.totalorder %s28, 0
      %p217 = por %p215, %p216
      %p218 = scmp.ne.s32.totalorder %s206, %s207
      %p219 = scmp.eq.s32.totalorder %s29, 1
      %p220 = por %p218, %p219
      %p222 = scmp.ne.s32.totalorder %s207, %s221
      %p223 = scmp.eq.s32.totalorder %s29, 0
      %p224 = por %p222, %p223
      %s226 = sadd.s32 %s225, 1
      %p229 = scmp.eq.s32.totalorder %s23, 1
      %p230 = scmp.ne.s32.totalorder %s225, %s227
      %p231 = scmp.eq.s32.totalorder %s23, 0
      %p232 = por %p230, %p231
      %p233 = scmp.ne.s32.totalorder %s225, %s227
      %p234 = scmp.eq.s32.totalorder %s28, 1
      %p235 = por %p233, %p234
      %p236 = scmp.ne.s32.totalorder %s227, %s228
      %p237 = scmp.eq.s32.totalorder %s28, 0
      %p238 = por %p236, %p237
      %p239 = scmp.ne.s32.totalorder %s227, %s228
      %p240 = scmp.eq.s32.totalorder %s29, 1
      %p241 = por %p239, %p240
      %p243 = scmp.ne.s32.totalorder %s228, %s242
      %p244 = scmp.eq.s32.totalorder %s29, 0
      %p245 = por %p243, %p244
      %s247 = sadd.s32 %s246, 1
      %p250 = scmp.eq.s32.totalorder %s23, 1
      %p251 = scmp.ne.s32.totalorder %s246, %s248
      %p252 = scmp.eq.s32.totalorder %s23, 0
      %p253 = por %p251, %p252
      %p254 = scmp.ne.s32.totalorder %s246, %s248
      %p255 = scmp.eq.s32.totalorder %s28, 1
      %p256 = por %p254, %p255
      %p257 = scmp.ne.s32.totalorder %s248, %s249
      %p258 = scmp.eq.s32.totalorder %s28, 0
      %p259 = por %p257, %p258
      %p260 = scmp.ne.s32.totalorder %s248, %s249
      %p261 = scmp.eq.s32.totalorder %s29, 1
      %p262 = por %p260, %p261
      %p264 = scmp.ne.s32.totalorder %s249, %s263
      %p265 = scmp.eq.s32.totalorder %s29, 0
      %p266 = por %p264, %p265
      %s268 = sadd.s32 %s267, 1
      %p271 = scmp.eq.s32.totalorder %s23, 1
      %p272 = scmp.ne.s32.totalorder %s267, %s269
      %p273 = scmp.eq.s32.totalorder %s23, 0
      %p274 = por %p272, %p273
      %p275 = scmp.ne.s32.totalorder %s267, %s269
      %p276 = scmp.eq.s32.totalorder %s28, 1
      %p277 = por %p275, %p276
      %p278 = scmp.ne.s32.totalorder %s269, %s270
      %p279 = scmp.eq.s32.totalorder %s28, 0
      %p280 = por %p278, %p279
      %p281 = scmp.ne.s32.totalorder %s269, %s270
      %p282 = scmp.eq.s32.totalorder %s29, 1
      %p283 = por %p281, %p282
      %p285 = scmp.ne.s32.totalorder %s270, %s284
      %p286 = scmp.eq.s32.totalorder %s29, 0
      %p287 = por %p285, %p286
      %s289 = sadd.s32 %s288, 1
      %p292 = scmp.eq.s32.totalorder %s23, 1
      %p293 = scmp.ne.s32.totalorder %s288, %s290
      %p294 = scmp.eq.s32.totalorder %s23, 0
      %p295 = por %p293, %p294
      %p296 = scmp.ne.s32.totalorder %s288, %s290
      %p297 = scmp.eq.s32.totalorder %s28, 1
      %p298 = por %p296, %p297
      %p299 = scmp.ne.s32.totalorder %s290, %s291
      %p300 = scmp.eq.s32.totalorder %s28, 0
      %p301 = por %p299, %p300
      %p302 = scmp.ne.s32.totalorder %s290, %s291
      %p303 = scmp.eq.s32.totalorder %s29, 1
      %p304 = por %p302, %p303
      %p306 = scmp.ne.s32.totalorder %s291, %s305
      %p307 = scmp.eq.s32.totalorder %s29, 0
      %p308 = por %p306, %p307
      %s309 = ssub.s32 %s23, %s30
      %p310 = scmp.eq.s32.totalorder %s309, 0
      %s312 = sadd.s32 %s311, 1
      %s313 = scalar_select %p310, %s311, %s312
      %p316 = pneg %p310
      %p317 = scmp.eq.s32.totalorder %s23, 1
      %p318 = por %p316, %p317
      %p319 = scmp.ne.s32.totalorder %s311, %s314
      %p320 = scmp.eq.s32.totalorder %s23, 0
      %p321 = por %p319, %p320
      %p322 = scmp.ne.s32.totalorder %s311, %s314
      %p323 = scmp.eq.s32.totalorder %s28, 1
      %p324 = por %p322, %p323
      %p325 = scmp.ne.s32.totalorder %s314, %s315
      %p326 = scmp.eq.s32.totalorder %s28, 0
      %p327 = por %p325, %p326
      %p328 = scmp.ne.s32.totalorder %s314, %s315
      %p329 = scmp.eq.s32.totalorder %s29, 1
      %p330 = por %p328, %p329
      %p332 = scmp.ne.s32.totalorder %s315, %s331
      %p333 = scmp.eq.s32.totalorder %s29, 0
      %p334 = por %p332, %p333
      %p335 = scmp.le.s32.totalorder 1, %s23
      %p336 = scmp.lt.s32.totalorder %s23, 3
      %p337 = pnand %p335, %p336
      %p338 = pneg %p337
      // Predicated region
      $region9: #{tpu_custom_call.1} parent=5 // pred_check
        _
      $region10: #{tpu_custom_call.1} parent=5 // pred_check_branch
        %340 = sbr.rel (%p337) target = $region12
      $region11: #{tpu_custom_call.1} parent=5 // pred_region
        %s341 = ssub.s32 %s23, 1
        // Predicated region
        $region13: #{tpu_custom_call.1} parent=11 // pred_check
          %p342 = pneg %p70
        $region14: #{tpu_custom_call.1} parent=11 // pred_check_branch
          %344 = sbr.rel (%p342) target = $region16
        $region15: #{tpu_custom_call.1} parent=11 // pred_region
          _
        $region16: #{tpu_custom_call.1} parent=11 // pred_fallthru
          _
        // Predicated region
        $region17: #{tpu_custom_call.1} parent=11 // pred_check
          %p345 = pneg %p91
        $region18: #{tpu_custom_call.1} parent=11 // pred_check_branch
          %347 = sbr.rel (%p345) target = $region20
        $region19: #{tpu_custom_call.1} parent=11 // pred_region
          _
        $region20: #{tpu_custom_call.1} parent=11 // pred_fallthru
          _
        // Predicated region
        $region21: #{tpu_custom_call.1} parent=11 // pred_check
          %p348 = pneg %p112
        $region22: #{tpu_custom_call.1} parent=11 // pred_check_branch
          %350 = sbr.rel (%p348) target = $region24
        $region23: #{tpu_custom_call.1} parent=11 // pred_region
          _
        $region24: #{tpu_custom_call.1} parent=11 // pred_fallthru
          _
        // Predicated region
        $region25: #{tpu_custom_call.1} parent=11 // pred_check
          %p351 = pneg %p133
        $region26: #{tpu_custom_call.1} parent=11 // pred_check_branch
          %353 = sbr.rel (%p351) target = $region28
        $region27: #{tpu_custom_call.1} parent=11 // pred_region
          _
        $region28: #{tpu_custom_call.1} parent=11 // pred_fallthru
          _
        // Predicated region
        $region29: #{tpu_custom_call.1} parent=11 // pred_check
          %p354 = pneg %p154
        $region30: #{tpu_custom_call.1} parent=11 // pred_check_branch
          %356 = sbr.rel (%p354) target = $region32
        $region31: #{tpu_custom_call.1} parent=11 // pred_region
          _
        $region32: #{tpu_custom_call.1} parent=11 // pred_fallthru
          _
        // Predicated region
        $region33: #{tpu_custom_call.1} parent=11 // pred_check
          %p357 = pneg %p175
        $region34: #{tpu_custom_call.1} parent=11 // pred_check_branch
          %359 = sbr.rel (%p357) target = $region36
        $region35: #{tpu_custom_call.1} parent=11 // pred_region
          _
        $region36: #{tpu_custom_call.1} parent=11 // pred_fallthru
          _
        // Predicated region
        $region37: #{tpu_custom_call.1} parent=11 // pred_check
          %p360 = pneg %p196
        $region38: #{tpu_custom_call.1} parent=11 // pred_check_branch
          %362 = sbr.rel (%p360) target = $region40
        $region39: #{tpu_custom_call.1} parent=11 // pred_region
          %364 = vsyncadd [#allocation3], 0
          %s365 = sshll.u32 %s7, 4
          %s366 = int_to_ptr.hbm [resolvable:$true] %s365
          %s367 = sshll.u32 [#allocation2], 4
          %s368 = int_to_ptr.vmem [resolvable:$true] %s367
          %373 = dma.hbm_to_vmem [thread:$0]  %s366, 256, %s368, [#allocation3], 64, 64, 4
        $region40: #{tpu_custom_call.1} parent=11 // pred_fallthru
          _
        // Predicated region
        $region41: #{tpu_custom_call.1} parent=11 // pred_check
          %p374 = pneg %p217
        $region42: #{tpu_custom_call.1} parent=11 // pred_check_branch
          %376 = sbr.rel (%p374) target = $region44
        $region43: #{tpu_custom_call.1} parent=11 // pred_region
          _
        $region44: #{tpu_custom_call.1} parent=11 // pred_fallthru
          _
        // Predicated region
        $region45: #{tpu_custom_call.1} parent=11 // pred_check
          %p377 = pneg %p238
        $region46: #{tpu_custom_call.1} parent=11 // pred_check_branch
          %379 = sbr.rel (%p377) target = $region48
        $region47: #{tpu_custom_call.1} parent=11 // pred_region
          _
        $region48: #{tpu_custom_call.1} parent=11 // pred_fallthru
          _
        // Predicated region
        $region49: #{tpu_custom_call.1} parent=11 // pred_check
          %p380 = pneg %p259
        $region50: #{tpu_custom_call.1} parent=11 // pred_check_branch
          %382 = sbr.rel (%p380) target = $region52
        $region51: #{tpu_custom_call.1} parent=11 // pred_region
          _
        $region52: #{tpu_custom_call.1} parent=11 // pred_fallthru
          _
        // Predicated region
        $region53: #{tpu_custom_call.1} parent=11 // pred_check
          %p383 = pneg %p280
        $region54: #{tpu_custom_call.1} parent=11 // pred_check_branch
          %385 = sbr.rel (%p383) target = $region56
        $region55: #{tpu_custom_call.1} parent=11 // pred_region
          _
        $region56: #{tpu_custom_call.1} parent=11 // pred_fallthru
          _
        // Predicated region
        $region57: #{tpu_custom_call.1} parent=11 // pred_check
          %p386 = pneg %p301
        $region58: #{tpu_custom_call.1} parent=11 // pred_check_branch
          %388 = sbr.rel (%p386) target = $region60
        $region59: #{tpu_custom_call.1} parent=11 // pred_region
          _
        $region60: #{tpu_custom_call.1} parent=11 // pred_fallthru
          _
      $region12: #{tpu_custom_call.1} parent=5 // pred_fallthru
        _
      %p389 = scmp.lt.s32.totalorder %s23, 2
      // Predicated region
      $region61: #{tpu_custom_call.1} parent=5 // pred_check
        %p390 = pneg %p389
      $region62: #{tpu_custom_call.1} parent=5 // pred_check_branch
        %392 = sbr.rel (%p390) target = $region64
      $region63: #{tpu_custom_call.1} parent=5 // pred_region
        // Predicated region
        $region65: #{tpu_custom_call.1} parent=63 // pred_check
          %p393 = pneg %p43
        $region66: #{tpu_custom_call.1} parent=63 // pred_check_branch
          %395 = sbr.rel (%p393) target = $region68
        $region67: #{tpu_custom_call.1} parent=63 // pred_region
          %p396 = scmp.lt.s32.totalorder %s23, 1
          %s397 = scalar_select %p396, %s23, 1
          %s398 = smul.addr %s397, 8
          %s399 = scalar_lea.vmem %s0, %s398
        $region68: #{tpu_custom_call.1} parent=63 // pred_fallthru
          _
      $region64: #{tpu_custom_call.1} parent=5 // pred_fallthru
        _
      %p400 = scmp.le.s32.totalorder 1, %s23
      %p401 = scmp.lt.s32.totalorder %s23, 3
      %p402 = pnand %p400, %p401
      %p403 = pneg %p402
      // Predicated region
      $region69: #{tpu_custom_call.1} parent=5 // pred_check
        _
      $region70: #{tpu_custom_call.1} parent=5 // pred_check_branch
        %405 = sbr.rel (%p402) target = $region72
      $region71: #{tpu_custom_call.1} parent=5 // pred_region
        %s406 = ssub.s32 %s23, 1
        // Predicated region
        $region73: #{tpu_custom_call.1} parent=71 // pred_check
          %p407 = pneg %p196
        $region74: #{tpu_custom_call.1} parent=71 // pred_check_branch
          %409 = sbr.rel (%p407) target = $region76
        $region75: #{tpu_custom_call.1} parent=71 // pred_region
          %411 = dma.done [#allocation3], 256
        $region76: #{tpu_custom_call.1} parent=71 // pred_fallthru
          _
        %p412 = scmp.lt.s32.totalorder %s28, 1
        %s413 = scalar_select %p412, %s28, 1
        %s414 = smul.addr %s413, 8
        %s415 = scalar_lea.vmem %s0, %s414
        %p416 = pneg %p49
        %p417 = pneg %p46
        %p418 = pneg %p70
        %p419 = pneg %p67
        %p420 = pneg %p91
        %p421 = pneg %p88
        %p422 = pneg %p112
        %p423 = pneg %p109
        %p424 = pneg %p133
        %p425 = pneg %p130
        %p426 = pneg %p154
        %p427 = pneg %p151
        %p428 = pneg %p175
        %p429 = pneg %p172
        %p430 = pneg %p196
        %p431 = pneg %p193
        %p432 = pneg %p217
        %p433 = pneg %p214
        %p434 = pneg %p238
        %p435 = pneg %p235
        %p436 = pneg %p259
        %p437 = pneg %p256
        %p438 = pneg %p280
        %p439 = pneg %p277
        %p440 = pneg %p301
        %p441 = pneg %p298
        %p442 = pneg %p327
        %p443 = pneg %p324
        %s444 = sand.u32 %s314, 1
        %s445 = scalar_lea.sflag [#allocation4], %s444
        %s446 = sand.u32 %s314, 1
        %s447 = smul.addr %s446, 8
        %s448 = scalar_lea.vmem [#allocation5], %s447
        %p449 = scmp.lt.s32.totalorder %s28, 1
        %s450 = scalar_select %p449, %s28, 1
        %s451 = smul.addr %s450, 8
        %s452 = scalar_lea.vmem %s0, %s451
        %v454 = vld [vmem:[%s452] sm:$0xff]
        %v455 = vpack.c.bf16 %v454, %v454
        %v456 = vld [vmem:[%s1] sm:$0xf]
        %v457 = vld [vmem:[%s1 + $0x4] sm:$0xf]
        %v458 = vld [vmem:[%s1 + $0x8] sm:$0xf]
        %v459 = vld [vmem:[%s1 + $0xc] sm:$0xf]
        %v460 = vld [vmem:[%s2] sm:$0x1]
        %v462 = vperm.slane %v460, 0
        %v468 = vunpack.c.l.b16 %v456
        %v469 = vunpack.c.l.b16 %v457
        %v470 = vunpack.c.l.b16 %v458
        %v471 = vunpack.c.l.b16 %v459
        %v472 = vpack.c.b16 %v469, %v468
        %v473 = vpack.c.b16 %v471, %v470
        %vm476 = vcmask 261120
        %v478 = vsel %vm476, %v455, 0
        %480 = vmatpush.bf16.msra.mxu0 0
        %481 = vmatpush.bf16.msra.mxu0 0
        %482 = vmatpush.bf16.msra.mxu0 0
        %483 = vmatpush.bf16.msra.mxu0 0
        %484 = vmatpush.bf16.msra.mxu0 0
        %485 = vmatpush.bf16.msra.mxu0 0
        %486 = vmatpush.bf16.msra.mxu0 %v473
        %487 = vmatpush.bf16.msra.mxu0 %v472
        %488 = vmatmul.bf16.gmra.mxu0 %v478
        %v489 = vpop.f32.mrf.mxu0
        %v490 = vadd.f32 %v462, %v489
        %v491 = vpop.f32.mrf.mxu0
        %492 = vdwg.mxu0
        %v493 = vmul.f32 %v490, 0.35355338
        %v494 = vpack.c.bf16 %v493, %v493
        %v495 = vpack.c.bf16 %v490, %v490
        %v497 = vunpack.c.l.b16 %v495
        %v498 = vpack.c.b16 %v497, %v497
        %499 = vrot.lane.b32.xlu0 %v498, 96
        %v500 = vpop.permute.xlu0 %499
        %vm501 = vcmask 64512
        %v503 = vsel %vm501, %v494, 0
        %v506 = vsel %vm501, %v500, 0
        %508 = vmatpush.bf16.xpose.msra.mxu0 0
        %509 = vmatpush.bf16.xpose.msra.mxu0 0
        %510 = vmatpush.bf16.xpose.msra.mxu0 0
        %511 = vmatpush.bf16.xpose.msra.mxu0 0
        %512 = vmatpush.bf16.xpose.msra.mxu0 0
        %513 = vmatpush.bf16.xpose.msra.mxu0 0
        %514 = vmatpush.bf16.xpose.msra.mxu0 0
        %515 = vmatpush.bf16.xpose.msra.mxu0 %v506
        %516 = vmatmul.bf16.gmra.mxu0 %v503
        %v517 = vpop.f32.mrf.mxu0
        %v518 = vadd.f32 0.0, %v517
        %v519 = vpop.f32.mrf.mxu0
        %520 = vdwg.mxu0
        %v521 = vsel %vm501, %v518, -inf
        %522 = vmax.xlane.f32.xlu0 %v521
        %v523 = vpop.xlane.xlu0 %522
        %v524 = vsub.f32 %v518, %v523
        %v525 = vmul.f32 %v524, 1.442695
        %v526 = vpow.pop %v525
        %v527 = vsel %vm501, %v526, 0.0
        %528 = vadd.xlane.f32.xlu0 %v527
        %v529 = vpop.xlane.xlu0 %528
        %v530 = vrcp.pop %v529
        %v531 = vmul.f32 %v526, %v530
        %v532 = vpack.c.bf16 %v531, %v531
        %533 = vrot.lane.b32.xlu0 %v498, 64
        %v534 = vpop.permute.xlu0 %533
        %v536 = vsel %vm501, %v532, 0
        %vm538 = vcmask 1043456
        %v540 = vsel %vm538, %v534, 0
        %542 = vmatpush.bf16.msra.mxu0 0
        %543 = vmatpush.bf16.msra.mxu0 0
        %544 = vmatpush.bf16.msra.mxu0 0
        %545 = vmatpush.bf16.msra.mxu0 0
        %546 = vmatpush.bf16.msra.mxu0 0
        %547 = vmatpush.bf16.msra.mxu0 0
        %548 = vmatpush.bf16.msra.mxu0 0
        %549 = vmatpush.bf16.msra.mxu0 %v540
        %550 = vmatmul.bf16.gmra.mxu0 %v536
        %v551 = vpop.f32.mrf.mxu0
        %v552 = vadd.f32 0.0, %v551
        %v553 = vpop.f32.mrf.mxu0
        %554 = vdwg.mxu0
        %v555 = vpack.c.bf16 %v552, %v552
        %v556 = vld [vmem:[%s3] sm:$0xf]
        %v558 = vunpack.c.l.b16 %v494
        %v559 = vpack.c.b16 %v558, %v558
        %560 = vrot.lane.b32.xlu0 %v559, 120
        %v561 = vpop.permute.xlu0 %560
        %562 = vrot.lane.b32.xlu0 %v498, 88
        %v563 = vpop.permute.xlu0 %562
        %v565 = vsel %vm501, %v561, 0
        %v568 = vsel %vm501, %v563, 0
        %570 = vmatpush.bf16.xpose.msra.mxu0 0
        %571 = vmatpush.bf16.xpose.msra.mxu0 0
        %572 = vmatpush.bf16.xpose.msra.mxu0 0
        %573 = vmatpush.bf16.xpose.msra.mxu0 0
        %574 = vmatpush.bf16.xpose.msra.mxu0 0
        %575 = vmatpush.bf16.xpose.msra.mxu0 0
        %576 = vmatpush.bf16.xpose.msra.mxu0 0
        %577 = vmatpush.bf16.xpose.msra.mxu0 %v568
        %578 = vmatmul.bf16.gmra.mxu0 %v565
        %v579 = vpop.f32.mrf.mxu0
        %v580 = vadd.f32 0.0, %v579
        %v581 = vpop.f32.mrf.mxu0
        %582 = vdwg.mxu0
        %v583 = vsel %vm501, %v580, -inf
        %584 = vmax.xlane.f32.xlu0 %v583
        %v585 = vpop.xlane.xlu0 %584
        %v586 = vsub.f32 %v580, %v585
        %v587 = vmul.f32 %v586, 1.442695
        %v588 = vpow.pop %v587
        %v589 = vsel %vm501, %v588, 0.0
        %590 = vadd.xlane.f32.xlu0 %v589
        %v591 = vpop.xlane.xlu0 %590
        %v592 = vrcp.pop %v591
        %v593 = vmul.f32 %v588, %v592
        %v594 = vpack.c.bf16 %v593, %v593
        %595 = vrot.lane.b32.xlu0 %v498, 56
        %v596 = vpop.permute.xlu0 %595
        %v598 = vsel %vm501, %v594, 0
        %v601 = vsel %vm538, %v596, 0
        %603 = vmatpush.bf16.msra.mxu0 0
        %604 = vmatpush.bf16.msra.mxu0 0
        %605 = vmatpush.bf16.msra.mxu0 0
        %606 = vmatpush.bf16.msra.mxu0 0
        %607 = vmatpush.bf16.msra.mxu0 0
        %608 = vmatpush.bf16.msra.mxu0 0
        %609 = vmatpush.bf16.msra.mxu0 0
        %610 = vmatpush.bf16.msra.mxu0 %v601
        %611 = vmatmul.bf16.gmra.mxu0 %v598
        %v612 = vpop.f32.mrf.mxu0
        %v613 = vadd.f32 0.0, %v612
        %v614 = vpop.f32.mrf.mxu0
        %615 = vdwg.mxu0
        %v616 = vpack.c.bf16 %v613, %v613
        %v617 = vld [vmem:[%s3 + $0x4] sm:$0xf]
        %v619 = vsel %vm501, %v616, 0
        %v622 = vsel %vm538, %v617, 0
        %624 = vmatpush.bf16.msra.mxu0 0
        %625 = vmatpush.bf16.msra.mxu0 0
        %626 = vmatpush.bf16.msra.mxu0 0
        %627 = vmatpush.bf16.msra.mxu0 0
        %628 = vmatpush.bf16.msra.mxu0 0
        %629 = vmatpush.bf16.msra.mxu0 0
        %630 = vmatpush.bf16.msra.mxu0 0
        %631 = vmatpush.bf16.msra.mxu0 %v622
        %632 = vmatmul.bf16.gmra.mxu0 %v619
        %v633 = vpop.f32.mrf.mxu0
        %v634 = vadd.f32 0.0, %v633
        %v635 = vpop.f32.mrf.mxu0
        %636 = vdwg.mxu0
        %v638 = vsel %vm501, %v555, 0
        %v641 = vsel %vm538, %v556, 0
        %643 = vmatpush.bf16.msra.mxu0 0
        %644 = vmatpush.bf16.msra.mxu0 0
        %645 = vmatpush.bf16.msra.mxu0 0
        %646 = vmatpush.bf16.msra.mxu0 0
        %647 = vmatpush.bf16.msra.mxu0 0
        %648 = vmatpush.bf16.msra.mxu0 0
        %649 = vmatpush.bf16.msra.mxu0 0
        %650 = vmatpush.bf16.msra.mxu0 %v641
        %651 = vmatmul.bf16.gmra.mxu0 %v638
        %v652 = vpop.f32.mrf.mxu0
        %v653 = vadd.f32 %v634, %v652
        %v654 = vpop.f32.mrf.mxu0
        %655 = vdwg.mxu0
        %656 = vrot.lane.b32.xlu0 %v559, 112
        %v657 = vpop.permute.xlu0 %656
        %658 = vrot.lane.b32.xlu0 %v498, 80
        %v659 = vpop.permute.xlu0 %658
        %v661 = vsel %vm501, %v657, 0
        %v664 = vsel %vm501, %v659, 0
        %666 = vmatpush.bf16.xpose.msra.mxu0 0
        %667 = vmatpush.bf16.xpose.msra.mxu0 0
        %668 = vmatpush.bf16.xpose.msra.mxu0 0
        %669 = vmatpush.bf16.xpose.msra.mxu0 0
        %670 = vmatpush.bf16.xpose.msra.mxu0 0
        %671 = vmatpush.bf16.xpose.msra.mxu0 0
        %672 = vmatpush.bf16.xpose.msra.mxu0 0
        %673 = vmatpush.bf16.xpose.msra.mxu0 %v664
        %674 = vmatmul.bf16.gmra.mxu0 %v661
        %v675 = vpop.f32.mrf.mxu0
        %v676 = vadd.f32 0.0, %v675
        %v677 = vpop.f32.mrf.mxu0
        %678 = vdwg.mxu0
        %v679 = vsel %vm501, %v676, -inf
        %680 = vmax.xlane.f32.xlu0 %v679
        %v681 = vpop.xlane.xlu0 %680
        %v682 = vsub.f32 %v676, %v681
        %v683 = vmul.f32 %v682, 1.442695
        %v684 = vpow.pop %v683
        %v685 = vsel %vm501, %v684, 0.0
        %686 = vadd.xlane.f32.xlu0 %v685
        %v687 = vpop.xlane.xlu0 %686
        %v688 = vrcp.pop %v687
        %v689 = vmul.f32 %v684, %v688
        %v690 = vpack.c.bf16 %v689, %v689
        %691 = vrot.lane.b32.xlu0 %v498, 48
        %v692 = vpop.permute.xlu0 %691
        %v694 = vsel %vm501, %v690, 0
        %v697 = vsel %vm538, %v692, 0
        %699 = vmatpush.bf16.msra.mxu0 0
        %700 = vmatpush.bf16.msra.mxu0 0
        %701 = vmatpush.bf16.msra.mxu0 0
        %702 = vmatpush.bf16.msra.mxu0 0
        %703 = vmatpush.bf16.msra.mxu0 0
        %704 = vmatpush.bf16.msra.mxu0 0
        %705 = vmatpush.bf16.msra.mxu0 0
        %706 = vmatpush.bf16.msra.mxu0 %v697
        %707 = vmatmul.bf16.gmra.mxu0 %v694
        %v708 = vpop.f32.mrf.mxu0
        %v709 = vadd.f32 0.0, %v708
        %v710 = vpop.f32.mrf.mxu0
        %711 = vdwg.mxu0
        %v712 = vpack.c.bf16 %v709, %v709
        %v713 = vld [vmem:[%s3 + $0x8] sm:$0xf]
        %v715 = vsel %vm501, %v712, 0
        %v718 = vsel %vm538, %v713, 0
        %720 = vmatpush.bf16.msra.mxu0 0
        %721 = vmatpush.bf16.msra.mxu0 0
        %722 = vmatpush.bf16.msra.mxu0 0
        %723 = vmatpush.bf16.msra.mxu0 0
        %724 = vmatpush.bf16.msra.mxu0 0
        %725 = vmatpush.bf16.msra.mxu0 0
        %726 = vmatpush.bf16.msra.mxu0 0
        %727 = vmatpush.bf16.msra.mxu0 %v718
        %728 = vmatmul.bf16.gmra.mxu0 %v715
        %v729 = vpop.f32.mrf.mxu0
        %v730 = vadd.f32 0.0, %v729
        %v731 = vpop.f32.mrf.mxu0
        %732 = vdwg.mxu0
        %v733 = vadd.f32 %v653, %v730
        %734 = vrot.lane.b32.xlu0 %v559, 104
        %v735 = vpop.permute.xlu0 %734
        %736 = vrot.lane.b32.xlu0 %v498, 72
        %v737 = vpop.permute.xlu0 %736
        %v739 = vsel %vm501, %v735, 0
        %v742 = vsel %vm501, %v737, 0
        %744 = vmatpush.bf16.xpose.msra.mxu0 0
        %745 = vmatpush.bf16.xpose.msra.mxu0 0
        %746 = vmatpush.bf16.xpose.msra.mxu0 0
        %747 = vmatpush.bf16.xpose.msra.mxu0 0
        %748 = vmatpush.bf16.xpose.msra.mxu0 0
        %749 = vmatpush.bf16.xpose.msra.mxu0 0
        %750 = vmatpush.bf16.xpose.msra.mxu0 0
        %751 = vmatpush.bf16.xpose.msra.mxu0 %v742
        %752 = vmatmul.bf16.gmra.mxu0 %v739
        %v753 = vpop.f32.mrf.mxu0
        %v754 = vadd.f32 0.0, %v753
        %v755 = vpop.f32.mrf.mxu0
        %756 = vdwg.mxu0
        %v757 = vsel %vm501, %v754, -inf
        %758 = vmax.xlane.f32.xlu0 %v757
        %v759 = vpop.xlane.xlu0 %758
        %v760 = vsub.f32 %v754, %v759
        %v761 = vmul.f32 %v760, 1.442695
        %v762 = vpow.pop %v761
        %v763 = vsel %vm501, %v762, 0.0
        %764 = vadd.xlane.f32.xlu0 %v763
        %v765 = vpop.xlane.xlu0 %764
        %v766 = vrcp.pop %v765
        %v767 = vmul.f32 %v762, %v766
        %v768 = vpack.c.bf16 %v767, %v767
        %769 = vrot.lane.b32.xlu0 %v498, 40
        %v770 = vpop.permute.xlu0 %769
        %v772 = vsel %vm501, %v768, 0
        %v775 = vsel %vm538, %v770, 0
        %777 = vmatpush.bf16.msra.mxu0 0
        %778 = vmatpush.bf16.msra.mxu0 0
        %779 = vmatpush.bf16.msra.mxu0 0
        %780 = vmatpush.bf16.msra.mxu0 0
        %781 = vmatpush.bf16.msra.mxu0 0
        %782 = vmatpush.bf16.msra.mxu0 0
        %783 = vmatpush.bf16.msra.mxu0 0
        %784 = vmatpush.bf16.msra.mxu0 %v775
        %785 = vmatmul.bf16.gmra.mxu0 %v772
        %v786 = vpop.f32.mrf.mxu0
        %v787 = vadd.f32 0.0, %v786
        %v788 = vpop.f32.mrf.mxu0
        %789 = vdwg.mxu0
        %v790 = vpack.c.bf16 %v787, %v787
        %v791 = vld [vmem:[%s3 + $0xc] sm:$0xf]
        %v793 = vsel %vm501, %v790, 0
        %v796 = vsel %vm538, %v791, 0
        %798 = vmatpush.bf16.msra.mxu0 0
        %799 = vmatpush.bf16.msra.mxu0 0
        %800 = vmatpush.bf16.msra.mxu0 0
        %801 = vmatpush.bf16.msra.mxu0 0
        %802 = vmatpush.bf16.msra.mxu0 0
        %803 = vmatpush.bf16.msra.mxu0 0
        %804 = vmatpush.bf16.msra.mxu0 0
        %805 = vmatpush.bf16.msra.mxu0 %v796
        %806 = vmatmul.bf16.gmra.mxu0 %v793
        %v807 = vpop.f32.mrf.mxu0
        %v808 = vadd.f32 0.0, %v807
        %v809 = vpop.f32.mrf.mxu0
        %810 = vdwg.mxu0
        %v811 = vadd.f32 %v733, %v808
        %v812 = vld [vmem:[%s4] sm:$0x1]
        %v814 = vperm.slane %v812, 0
        %v816 = vadd.f32 %v811, %v814
        %v817 = vadd.f32 %v454, %v816
        %v818 = vld [vmem:[%s5] sm:$0x1]
        %v819 = vld [vmem:[%s6] sm:$0x1]
        %v820 = vsel %vm476, %v817, 0.0
        %821 = vadd.xlane.f32.xlu0 %v820
        %v822 = vpop.xlane.xlu0 %821
        %v823 = vmul.f32 %v822, 0.03125
        %v824 = vsub.f32 %v817, %v823
        %v825 = vmul.f32 %v824, %v824
        %v826 = vsel %vm476, %v825, 0.0
        %827 = vadd.xlane.f32.xlu0 %v826
        %v828 = vpop.xlane.xlu0 %827
        %v829 = vmul.f32 %v828, 0.03125
        %v830 = vadd.f32 %v829, 1e-05
        %v831 = vrsqrt.pop %v830
        %v832 = vmul.f32 %v831, %v830
        %v833 = vmul.f32 %v832, %v831
        %v834 = vmul.f32 0.5, %v833
        %v835 = vsub.f32 1.5, %v834
        %v836 = vmul.f32 %v831, %v835
        %vm837 = vweird.f32 %v830
        %vm838 = vweird.f32 %v831
        %vm839 = vmor %vm837, %vm838
        %v840 = vsel %vm839, %v831, %v836
        %v841 = vmul.f32 %v824, %v840
        %v843 = vperm.slane %v818, 0
        %v845 = vmul.f32 %v841, %v843
        %v847 = vperm.slane %v819, 0
        %v849 = vadd.f32 %v845, %v847
        %v850 = vpack.c.bf16 %v849, %v849
        %v851 = vld [vmem:[#allocation2] sm:$0xf]
        %v852 = vld [vmem:[#allocation2 + $0x4] sm:$0xf]
        %v853 = vld [vmem:[#allocation2 + $0x8] sm:$0xf]
        %v854 = vld [vmem:[#allocation2 + $0xc] sm:$0xf]
        %v855 = vld [vmem:[%s8] sm:$0x1]
        %v857 = vperm.slane %v855, 0
        %v863 = vunpack.c.l.b16 %v851
        %v864 = vunpack.c.l.b16 %v852
        %v865 = vunpack.c.l.b16 %v853
        %v866 = vunpack.c.l.b16 %v854
        %v867 = vpack.c.b16 %v864, %v863
        %v868 = vpack.c.b16 %v866, %v865
        %v872 = vsel %vm476, %v850, 0
        %874 = vmatpush.bf16.msra.mxu0 0
        %875 = vmatpush.bf16.msra.mxu0 0
        %876 = vmatpush.bf16.msra.mxu0 0
        %877 = vmatpush.bf16.msra.mxu0 0
        %878 = vmatpush.bf16.msra.mxu0 0
        %879 = vmatpush.bf16.msra.mxu0 0
        %880 = vmatpush.bf16.msra.mxu0 %v868
        %881 = vmatpush.bf16.msra.mxu0 %v867
        %882 = vmatmul.bf16.gmra.mxu0 %v872
        %v883 = vpop.f32.mrf.mxu0
        %v884 = vadd.f32 %v857, %v883
        %v885 = vpop.f32.mrf.mxu0
        %886 = vdwg.mxu0
        %v887 = vmax.f32 %v884, 0.0
        %v888 = vpack.c.bf16 %v887, %v887
        %v889 = vld [vmem:[%s9] sm:$0xf]
        %v890 = vld [vmem:[%s9 + $0x4] sm:$0xf]
        %v891 = vld [vmem:[%s9 + $0x8] sm:$0xf]
        %v892 = vld [vmem:[%s9 + $0xc] sm:$0xf]
        %v893 = vld [vmem:[%s9 + $0x10] sm:$0xf]
        %v894 = vld [vmem:[%s9 + $0x14] sm:$0xf]
        %v895 = vld [vmem:[%s9 + $0x18] sm:$0xf]
        %v896 = vld [vmem:[%s9 + $0x1c] sm:$0xf]
        %v897 = vld [vmem:[%s10] sm:$0x1]
        %v899 = vperm.slane %v897, 0
        %v909 = vunpack.c.l.b16 %v889
        %v910 = vunpack.c.l.b16 %v890
        %v911 = vunpack.c.l.b16 %v891
        %v912 = vunpack.c.l.b16 %v892
        %v913 = vunpack.c.l.b16 %v893
        %v914 = vunpack.c.l.b16 %v894
        %v915 = vunpack.c.l.b16 %v895
        %v916 = vunpack.c.l.b16 %v896
        %v917 = vpack.c.b16 %v910, %v909
        %v918 = vpack.c.b16 %v912, %v911
        %v919 = vpack.c.b16 %v914, %v913
        %v920 = vpack.c.b16 %v916, %v915
        %vm925 = vcmask 523264
        %v927 = vsel %vm925, %v888, 0
        %929 = vmatpush.bf16.msra.mxu0 0
        %930 = vmatpush.bf16.msra.mxu0 0
        %931 = vmatpush.bf16.msra.mxu0 0
        %932 = vmatpush.bf16.msra.mxu0 0
        %933 = vmatpush.bf16.msra.mxu0 %v920
        %934 = vmatpush.bf16.msra.mxu0 %v919
        %935 = vmatpush.bf16.msra.mxu0 %v918
        %936 = vmatpush.bf16.msra.mxu0 %v917
        %937 = vmatmul.bf16.gmra.mxu0 %v927
        %v938 = vpop.f32.mrf.mxu0
        %v939 = vadd.f32 %v899, %v938
        %v940 = vpop.f32.mrf.mxu0
        %941 = vdwg.mxu0
        %v942 = vadd.f32 %v849, %v939
        %v943 = vld [vmem:[%s11] sm:$0x1]
        %v944 = vld [vmem:[%s12] sm:$0x1]
        %v945 = vsel %vm476, %v942, 0.0
        %946 = vadd.xlane.f32.xlu0 %v945
        %v947 = vpop.xlane.xlu0 %946
        %v948 = vmul.f32 %v947, 0.03125
        %v949 = vsub.f32 %v942, %v948
        %v950 = vmul.f32 %v949, %v949
        %v951 = vsel %vm476, %v950, 0.0
        %952 = vadd.xlane.f32.xlu0 %v951
        %v953 = vpop.xlane.xlu0 %952
        %v954 = vmul.f32 %v953, 0.03125
        %v955 = vadd.f32 %v954, 1e-05
        %v956 = vrsqrt.pop %v955
        %v957 = vmul.f32 %v956, %v955
        %v958 = vmul.f32 %v957, %v956
        %v959 = vmul.f32 0.5, %v958
        %v960 = vsub.f32 1.5, %v959
        %v961 = vmul.f32 %v956, %v960
        %vm962 = vweird.f32 %v955
        %vm963 = vweird.f32 %v956
        %vm964 = vmor %vm962, %vm963
        %v965 = vsel %vm964, %v956, %v961
        %v966 = vmul.f32 %v949, %v965
        %v968 = vperm.slane %v943, 0
        %v970 = vmul.f32 %v966, %v968
        %v972 = vperm.slane %v944, 0
        %v974 = vadd.f32 %v970, %v972
        %975 = vst.msk [vmem:[%s448] sm:$0xff] %vm476, %v974
        %s976 = sand.u32 %s314, 1
        %s977 = scalar_lea.sflag [#allocation4], %s976
        %s978 = sand.u32 %s314, 1
        %s979 = smul.addr %s978, 8
        %s980 = scalar_lea.vmem [#allocation5], %s979
        // Predicated region
        $region77: #{tpu_custom_call.1} parent=71 // pred_check
          %p981 = pneg %p324
        $region78: #{tpu_custom_call.1} parent=71 // pred_check_branch
          %983 = sbr.rel (%p981) target = $region80
        $region79: #{tpu_custom_call.1} parent=71 // pred_region
          %985 = vsyncadd %s977, 0
          %s986 = smul.addr %s28, 8
          %s987 = scalar_lea.hbm %s13, %s986
          %s989 = sshll.u32 %s980, 4
          %s990 = int_to_ptr.vmem [resolvable:$true] %s989
          %s991 = sshll.u32 %s987, 4
          %s992 = int_to_ptr.hbm [resolvable:$true] %s991
          %994 = dma.vmem_to_hbm [thread:$0]  %s990, 128, %s992, %s977
        $region80: #{tpu_custom_call.1} parent=71 // pred_fallthru
          _
      $region72: #{tpu_custom_call.1} parent=5 // pred_fallthru
        _
      %p995 = scmp.le.s32.totalorder 2, %s23
      // Predicated region
      $region81: #{tpu_custom_call.1} parent=5 // pred_check
        %p996 = pneg %p995
      $region82: #{tpu_custom_call.1} parent=5 // pred_check_branch
        %998 = sbr.rel (%p996) target = $region84
      $region83: #{tpu_custom_call.1} parent=5 // pred_region
        %s999 = ssub.s32 %s23, 2
        // Predicated region
        $region85: #{tpu_custom_call.1} parent=83 // pred_check
          %p1000 = pneg %p330
        $region86: #{tpu_custom_call.1} parent=83 // pred_check_branch
          %1002 = sbr.rel (%p1000) target = $region88
        $region87: #{tpu_custom_call.1} parent=83 // pred_region
          %s1003 = sand.u32 %s315, 1
          %s1004 = scalar_lea.sflag [#allocation4], %s1003
          %s1005 = sand.u32 %s315, 1
          %s1006 = smul.addr %s1005, 8
          %s1007 = scalar_lea.vmem [#allocation5], %s1006
          %1009 = dma.done %s1004, 128
        $region88: #{tpu_custom_call.1} parent=83 // pred_fallthru
          _
      $region84: #{tpu_custom_call.1} parent=5 // pred_fallthru
        _
    $region6: #{tpu_custom_call.1} parent=1 // loop_footer
      %s27 = sadd.s32 1, %s23
    $region7: #{tpu_custom_call.1} parent=1 // loop_footer_branch
      %22 = sbr.rel target = $region3
    $region8: #{tpu_custom_call.1} parent=1 // loop_exit
      _
    %1010 = vsyncpa [#allocation3], 1
    %s1011 = scalar_lea.sflag [#allocation3], 1
    %1012 = vsyncpa %s1011, 1
    %1013 = vsyncpa [#allocation4], 1
    %s1014 = scalar_lea.sflag [#allocation4], 1
    %1015 = vsyncpa %s1014, 1

// kernel: tpu_custom_call.1
$region0: #{tpu_custom_call.1}
  #allocation0 [shape = 'u32[]', space=smem, size = 0x4, offset = 0x4, fixed_abs, tag = 'smem constant byte address 0x4 - core index']
  #allocation1 [shape = 'u32[72,128]{1,0:T(1,128)}', space=vmem, size = 0x9000, scoped, tag = 'internal scratch']
  %s0 = inlined_call_operand.vmem [shape: f32[2,8,32], index: 0, kind: input, shape index: {}]
  %s1 = inlined_call_operand.vmem [shape: bf16[32,96], index: 1, kind: input, shape index: {}]
  %s2 = inlined_call_operand.vmem [shape: f32[1,96], index: 2, kind: input, shape index: {}]
  %s3 = inlined_call_operand.vmem [shape: bf16[32,32], index: 3, kind: input, shape index: {}]
  %s4 = inlined_call_operand.vmem [shape: f32[1,32], index: 4, kind: input, shape index: {}]
  %s5 = inlined_call_operand.vmem [shape: f32[1,32], index: 5, kind: input, shape index: {}]
  %s6 = inlined_call_operand.vmem [shape: f32[1,32], index: 6, kind: input, shape index: {}]
  %s7 = inlined_call_operand.hbm [shape: bf16[32,64], index: 7, kind: input, shape index: {}]
  %s8 = inlined_call_operand.vmem [shape: f32[1,64], index: 8, kind: input, shape index: {}]
  %s9 = inlined_call_operand.vmem [shape: bf16[64,32], index: 9, kind: input, shape index: {}]
  %s10 = inlined_call_operand.vmem [shape: f32[1,32], index: 10, kind: input, shape index: {}]
  %s11 = inlined_call_operand.vmem [shape: f32[1,32], index: 11, kind: input, shape index: {}]
  %s12 = inlined_call_operand.vmem [shape: f32[1,32], index: 12, kind: input, shape index: {}]
  %s13 = inlined_call_operand.hbm [shape: f32[2,8,32], index: 13, kind: output, shape index: {}]
  %s14 = sld [smem:[#allocation0]]
  $region89: #{tpu_custom_call.1} parent=0
    _
  %s16 = ssub.s32 1, %s14
  %s17 = scalar_select 0, %s16, %s14
  $region1: #{tpu_custom_call.1} parent=0
    #allocation2 [shape = 'u8[8192]{0}', space=vmem, size = 0x2000, scoped, tag = 'input window, operand 7, single buffered']
    #allocation3 [shape = 's32[2]{0}', space=sflag, size = 0x8, scoped, tag = 'scoped memory for tpu_custom_call.1']
    #allocation4 [shape = 's32[2]{0}', space=sflag, size = 0x8, scoped, tag = 'scoped memory for tpu_custom_call.1']
    #allocation5 [shape = 'u8[8192]{0}', space=vmem, size = 0x2000, scoped, tag = 'output window, operand 0']
    %18 = vsyncpa [#allocation3], 0
    %19 = vsyncpa [#allocation4], 0
    %s20 = scalar_lea.sflag [#allocation4], 1
    %21 = vsyncpa %s20, 0
    loop: start=0, step=1, limit=4
    $region2: #{tpu_custom_call.1} parent=1 // loop_pre_header
      _
    $region3: #{tpu_custom_call.1} parent=1 // loop_header
      %s23 = sphi 0, %s27
      %p24 = scmp.ge.s32.totalorder %s23, 4
      %s33 = sphi 0, %s35
      %s36 = sphi 0, %s33
      %s37 = sphi 0, %s36
      %s53 = sphi 0, %s37
      %s57 = sphi 0, %s57
      %s59 = sphi 0, %s57
      %s60 = sphi 0, %s59
      %s74 = sphi 0, %s60
      %s78 = sphi 0, %s78
      %s80 = sphi 0, %s78
      %s81 = sphi 0, %s80
      %s95 = sphi 0, %s81
      %s99 = sphi 0, %s99
      %s101 = sphi 0, %s99
      %s102 = sphi 0, %s101
      %s116 = sphi 0, %s102
      %s120 = sphi 0, %s120
      %s122 = sphi 0, %s120
      %s123 = sphi 0, %s122
      %s137 = sphi 0, %s123
      %s141 = sphi 0, %s141
      %s143 = sphi 0, %s141
      %s144 = sphi 0, %s143
      %s158 = sphi 0, %s144
      %s162 = sphi 0, %s162
      %s164 = sphi 0, %s162
      %s165 = sphi 0, %s164
      %s179 = sphi 0, %s165
      %s183 = sphi 0, %s183
      %s185 = sphi 0, %s183
      %s186 = sphi 0, %s185
      %s200 = sphi 0, %s186
      %s204 = sphi 0, %s204
      %s206 = sphi 0, %s204
      %s207 = sphi 0, %s206
      %s221 = sphi 0, %s207
      %s225 = sphi 0, %s225
      %s227 = sphi 0, %s225
      %s228 = sphi 0, %s227
      %s242 = sphi 0, %s228
      %s246 = sphi 0, %s246
      %s248 = sphi 0, %s246
      %s249 = sphi 0, %s248
      %s263 = sphi 0, %s249
      %s267 = sphi 0, %s267
      %s269 = sphi 0, %s267
      %s270 = sphi 0, %s269
      %s284 = sphi 0, %s270
      %s288 = sphi 0, %s288
      %s290 = sphi 0, %s288
      %s291 = sphi 0, %s290
      %s305 = sphi 0, %s291
      %s311 = sphi 0, %s313
      %s314 = sphi 0, %s311
      %s315 = sphi 0, %s314
      %s331 = sphi 0, %s315
    $region4: #{tpu_custom_call.1} parent=1 // loop_header_branch
      %26 = sbr.rel (%p24) target = $region8
    $region5: #{tpu_custom_call.1} parent=1 // loop_body
      %s28 = ssub.s32 %s23, 1
      %s29 = ssub.s32 %s23, 2
      %s30 = sadd.s32 %s23, 1
      %s31 = ssub.s32 %s23, %s30
      %p32 = scmp.eq.s32.totalorder %s31, 0
      %s34 = sadd.s32 %s33, 1
      %s35 = scalar_select %p32, %s33, %s34
      %p38 = pneg %p32
      %p39 = scmp.eq.s32.totalorder %s23, 1
      %p40 = por %p38, %p39
      %p41 = scmp.ne.s32.totalorder %s33, %s36
      %p42 = scmp.eq.s32.totalorder %s23, 0
      %p43 = por %p41, %p42
      %p44 = scmp.ne.s32.totalorder %s33, %s36
      %p45 = scmp.eq.s32.totalorder %s28, 1
      %p46 = por %p44, %p45
      %p47 = scmp.ne.s32.totalorder %s36, %s37
      %p48 = scmp.eq.s32.totalorder %s28, 0
      %p49 = por %p47, %p48
      %p50 = scmp.ne.s32.totalorder %s36, %s37
      %p51 = scmp.eq.s32.totalorder %s29, 1
      %p52 = por %p50, %p51
      %p54 = scmp.ne.s32.totalorder %s37, %s53
      %p55 = scmp.eq.s32.totalorder %s29, 0
      %p56 = por %p54, %p55
      %s58 = sadd.s32 %s57, 1
      %p61 = scmp.eq.s32.totalorder %s23, 1
      %p62 = scmp.ne.s32.totalorder %s57, %s59
      %p63 = scmp.eq.s32.totalorder %s23, 0
      %p64 = por %p62, %p63
      %p65 = scmp.ne.s32.totalorder %s57, %s59
      %p66 = scmp.eq.s32.totalorder %s28, 1
      %p67 = por %p65, %p66
      %p68 = scmp.ne.s32.totalorder %s59, %s60
      %p69 = scmp.eq.s32.totalorder %s28, 0
      %p70 = por %p68, %p69
      %p71 = scmp.ne.s32.totalorder %s59, %s60
      %p72 = scmp.eq.s32.totalorder %s29, 1
      %p73 = por %p71, %p72
      %p75 = scmp.ne.s32.totalorder %s60, %s74
      %p76 = scmp.eq.s32.totalorder %s29, 0
      %p77 = por %p75, %p76
      %s79 = sadd.s32 %s78, 1
      %p82 = scmp.eq.s32.totalorder %s23, 1
      %p83 = scmp.ne.s32.totalorder %s78, %s80
      %p84 = scmp.eq.s32.totalorder %s23, 0
      %p85 = por %p83, %p84
      %p86 = scmp.ne.s32.totalorder %s78, %s80
      %p87 = scmp.eq.s32.totalorder %s28, 1
      %p88 = por %p86, %p87
      %p89 = scmp.ne.s32.totalorder %s80, %s81
      %p90 = scmp.eq.s32.totalorder %s28, 0
      %p91 = por %p89, %p90
      %p92 = scmp.ne.s32.totalorder %s80, %s81
      %p93 = scmp.eq.s32.totalorder %s29, 1
      %p94 = por %p92, %p93
      %p96 = scmp.ne.s32.totalorder %s81, %s95
      %p97 = scmp.eq.s32.totalorder %s29, 0
      %p98 = por %p96, %p97
      %s100 = sadd.s32 %s99, 1
      %p103 = scmp.eq.s32.totalorder %s23, 1
      %p104 = scmp.ne.s32.totalorder %s99, %s101
      %p105 = scmp.eq.s32.totalorder %s23, 0
      %p106 = por %p104, %p105
      %p107 = scmp.ne.s32.totalorder %s99, %s101
      %p108 = scmp.eq.s32.totalorder %s28, 1
      %p109 = por %p107, %p108
      %p110 = scmp.ne.s32.totalorder %s101, %s102
      %p111 = scmp.eq.s32.totalorder %s28, 0
      %p112 = por %p110, %p111
      %p113 = scmp.ne.s32.totalorder %s101, %s102
      %p114 = scmp.eq.s32.totalorder %s29, 1
      %p115 = por %p113, %p114
      %p117 = scmp.ne.s32.totalorder %s102, %s116
      %p118 = scmp.eq.s32.totalorder %s29, 0
      %p119 = por %p117, %p118
      %s121 = sadd.s32 %s120, 1
      %p124 = scmp.eq.s32.totalorder %s23, 1
      %p125 = scmp.ne.s32.totalorder %s120, %s122
      %p126 = scmp.eq.s32.totalorder %s23, 0
      %p127 = por %p125, %p126
      %p128 = scmp.ne.s32.totalorder %s120, %s122
      %p129 = scmp.eq.s32.totalorder %s28, 1
      %p130 = por %p128, %p129
      %p131 = scmp.ne.s32.totalorder %s122, %s123
      %p132 = scmp.eq.s32.totalorder %s28, 0
      %p133 = por %p131, %p132
      %p134 = scmp.ne.s32.totalorder %s122, %s123
      %p135 = scmp.eq.s32.totalorder %s29, 1
      %p136 = por %p134, %p135
      %p138 = scmp.ne.s32.totalorder %s123, %s137
      %p139 = scmp.eq.s32.totalorder %s29, 0
      %p140 = por %p138, %p139
      %s142 = sadd.s32 %s141, 1
      %p145 = scmp.eq.s32.totalorder %s23, 1
      %p146 = scmp.ne.s32.totalorder %s141, %s143
      %p147 = scmp.eq.s32.totalorder %s23, 0
      %p148 = por %p146, %p147
      %p149 = scmp.ne.s32.totalorder %s141, %s143
      %p150 = scmp.eq.s32.totalorder %s28, 1
      %p151 = por %p149, %p150
      %p152 = scmp.ne.s32.totalorder %s143, %s144
      %p153 = scmp.eq.s32.totalorder %s28, 0
      %p154 = por %p152, %p153
      %p155 = scmp.ne.s32.totalorder %s143, %s144
      %p156 = scmp.eq.s32.totalorder %s29, 1
      %p157 = por %p155, %p156
      %p159 = scmp.ne.s32.totalorder %s144, %s158
      %p160 = scmp.eq.s32.totalorder %s29, 0
      %p161 = por %p159, %p160
      %s163 = sadd.s32 %s162, 1
      %p166 = scmp.eq.s32.totalorder %s23, 1
      %p167 = scmp.ne.s32.totalorder %s162, %s164
      %p168 = scmp.eq.s32.totalorder %s23, 0
      %p169 = por %p167, %p168
      %p170 = scmp.ne.s32.totalorder %s162, %s164
      %p171 = scmp.eq.s32.totalorder %s28, 1
      %p172 = por %p170, %p171
      %p173 = scmp.ne.s32.totalorder %s164, %s165
      %p174 = scmp.eq.s32.totalorder %s28, 0
      %p175 = por %p173, %p174
      %p176 = scmp.ne.s32.totalorder %s164, %s165
      %p177 = scmp.eq.s32.totalorder %s29, 1
      %p178 = por %p176, %p177
      %p180 = scmp.ne.s32.totalorder %s165, %s179
      %p181 = scmp.eq.s32.totalorder %s29, 0
      %p182 = por %p180, %p181
      %s184 = sadd.s32 %s183, 1
      %p187 = scmp.eq.s32.totalorder %s23, 1
      %p188 = scmp.ne.s32.totalorder %s183, %s185
      %p189 = scmp.eq.s32.totalorder %s23, 0
      %p190 = por %p188, %p189
      %p191 = scmp.ne.s32.totalorder %s183, %s185
      %p192 = scmp.eq.s32.totalorder %s28, 1
      %p193 = por %p191, %p192
      %p194 = scmp.ne.s32.totalorder %s185, %s186
      %p195 = scmp.eq.s32.totalorder %s28, 0
      %p196 = por %p194, %p195
      %p197 = scmp.ne.s32.totalorder %s185, %s186
      %p198 = scmp.eq.s32.totalorder %s29, 1
      %p199 = por %p197, %p198
      %p201 = scmp.ne.s32.totalorder %s186, %s200
      %p202 = scmp.eq.s32.totalorder %s29, 0
      %p203 = por %p201, %p202
      %s205 = sadd.s32 %s204, 1
      %p208 = scmp.eq.s32.totalorder %s23, 1
      %p209 = scmp.ne.s32.totalorder %s204, %s206
      %p210 = scmp.eq.s32.totalorder %s23, 0
      %p211 = por %p209, %p210
      %p212 = scmp.ne.s32.totalorder %s204, %s206
      %p213 = scmp.eq.s32.totalorder %s28, 1
      %p214 = por %p212, %p213
      %p215 = scmp.ne.s32.totalorder %s206, %s207
      %p216 = scmp.eq.s32.totalorder %s28, 0
      %p217 = por %p215, %p216
      %p218 = scmp.ne.s32.totalorder %s206, %s207
      %p219 = scmp.eq.s32.totalorder %s29, 1
      %p220 = por %p218, %p219
      %p222 = scmp.ne.s32.totalorder %s207, %s221
      %p223 = scmp.eq.s32.totalorder %s29, 0
      %p224 = por %p222, %p223
      %s226 = sadd.s32 %s225, 1
      %p229 = scmp.eq.s32.totalorder %s23, 1
      %p230 = scmp.ne.s32.totalorder %s225, %s227
      %p231 = scmp.eq.s32.totalorder %s23, 0
      %p232 = por %p230, %p231
      %p233 = scmp.ne.s32.totalorder %s225, %s227
      %p234 = scmp.eq.s32.totalorder %s28, 1
      %p235 = por %p233, %p234
      %p236 = scmp.ne.s32.totalorder %s227, %s228
      %p237 = scmp.eq.s32.totalorder %s28, 0
      %p238 = por %p236, %p237
      %p239 = scmp.ne.s32.totalorder %s227, %s228
      %p240 = scmp.eq.s32.totalorder %s29, 1
      %p241 = por %p239, %p240
      %p243 = scmp.ne.s32.totalorder %s228, %s242
      %p244 = scmp.eq.s32.totalorder %s29, 0
      %p245 = por %p243, %p244
      %s247 = sadd.s32 %s246, 1
      %p250 = scmp.eq.s32.totalorder %s23, 1
      %p251 = scmp.ne.s32.totalorder %s246, %s248
      %p252 = scmp.eq.s32.totalorder %s23, 0
      %p253 = por %p251, %p252
      %p254 = scmp.ne.s32.totalorder %s246, %s248
      %p255 = scmp.eq.s32.totalorder %s28, 1
      %p256 = por %p254, %p255
      %p257 = scmp.ne.s32.totalorder %s248, %s249
      %p258 = scmp.eq.s32.totalorder %s28, 0
      %p259 = por %p257, %p258
      %p260 = scmp.ne.s32.totalorder %s248, %s249
      %p261 = scmp.eq.s32.totalorder %s29, 1
      %p262 = por %p260, %p261
      %p264 = scmp.ne.s32.totalorder %s249, %s263
      %p265 = scmp.eq.s32.totalorder %s29, 0
      %p266 = por %p264, %p265
      %s268 = sadd.s32 %s267, 1
      %p271 = scmp.eq.s32.totalorder %s23, 1
      %p272 = scmp.ne.s32.totalorder %s267, %s269
      %p273 = scmp.eq.s32.totalorder %s23, 0
      %p274 = por %p272, %p273
      %p275 = scmp.ne.s32.totalorder %s267, %s269
      %p276 = scmp.eq.s32.totalorder %s28, 1
      %p277 = por %p275, %p276
      %p278 = scmp.ne.s32.totalorder %s269, %s270
      %p279 = scmp.eq.s32.totalorder %s28, 0
      %p280 = por %p278, %p279
      %p281 = scmp.ne.s32.totalorder %s269, %s270
      %p282 = scmp.eq.s32.totalorder %s29, 1
      %p283 = por %p281, %p282
      %p285 = scmp.ne.s32.totalorder %s270, %s284
      %p286 = scmp.eq.s32.totalorder %s29, 0
      %p287 = por %p285, %p286
      %s289 = sadd.s32 %s288, 1
      %p292 = scmp.eq.s32.totalorder %s23, 1
      %p293 = scmp.ne.s32.totalorder %s288, %s290
      %p294 = scmp.eq.s32.totalorder %s23, 0
      %p295 = por %p293, %p294
      %p296 = scmp.ne.s32.totalorder %s288, %s290
      %p297 = scmp.eq.s32.totalorder %s28, 1
      %p298 = por %p296, %p297
      %p299 = scmp.ne.s32.totalorder %s290, %s291
      %p300 = scmp.eq.s32.totalorder %s28, 0
      %p301 = por %p299, %p300
      %p302 = scmp.ne.s32.totalorder %s290, %s291
      %p303 = scmp.eq.s32.totalorder %s29, 1
      %p304 = por %p302, %p303
      %p306 = scmp.ne.s32.totalorder %s291, %s305
      %p307 = scmp.eq.s32.totalorder %s29, 0
      %p308 = por %p306, %p307
      %s309 = ssub.s32 %s23, %s30
      %p310 = scmp.eq.s32.totalorder %s309, 0
      %s312 = sadd.s32 %s311, 1
      %s313 = scalar_select %p310, %s311, %s312
      %p316 = pneg %p310
      %p317 = scmp.eq.s32.totalorder %s23, 1
      %p318 = por %p316, %p317
      %p319 = scmp.ne.s32.totalorder %s311, %s314
      %p320 = scmp.eq.s32.totalorder %s23, 0
      %p321 = por %p319, %p320
      %p322 = scmp.ne.s32.totalorder %s311, %s314
      %p323 = scmp.eq.s32.totalorder %s28, 1
      %p324 = por %p322, %p323
      %p325 = scmp.ne.s32.totalorder %s314, %s315
      %p326 = scmp.eq.s32.totalorder %s28, 0
      %p327 = por %p325, %p326
      %p328 = scmp.ne.s32.totalorder %s314, %s315
      %p329 = scmp.eq.s32.totalorder %s29, 1
      %p330 = por %p328, %p329
      %p332 = scmp.ne.s32.totalorder %s315, %s331
      %p333 = scmp.eq.s32.totalorder %s29, 0
      %p334 = por %p332, %p333
      %p335 = scmp.le.s32.totalorder 1, %s23
      %p336 = scmp.lt.s32.totalorder %s23, 3
      %p337 = pnand %p335, %p336
      %p338 = pneg %p337
      // Predicated region
      $region9: #{tpu_custom_call.1} parent=5 // pred_check
        _
      $region10: #{tpu_custom_call.1} parent=5 // pred_check_branch
        %340 = sbr.rel (%p337) target = $region12
      $region11: #{tpu_custom_call.1} parent=5 // pred_region
        %s341 = ssub.s32 %s23, 1
        // Predicated region
        $region13: #{tpu_custom_call.1} parent=11 // pred_check
          %p342 = pneg %p70
        $region14: #{tpu_custom_call.1} parent=11 // pred_check_branch
          %344 = sbr.rel (%p342) target = $region16
        $region15: #{tpu_custom_call.1} parent=11 // pred_region
          _
        $region16: #{tpu_custom_call.1} parent=11 // pred_fallthru
          _
        // Predicated region
        $region17: #{tpu_custom_call.1} parent=11 // pred_check
          %p345 = pneg %p91
        $region18: #{tpu_custom_call.1} parent=11 // pred_check_branch
          %347 = sbr.rel (%p345) target = $region20
        $region19: #{tpu_custom_call.1} parent=11 // pred_region
          _
        $region20: #{tpu_custom_call.1} parent=11 // pred_fallthru
          _
        // Predicated region
        $region21: #{tpu_custom_call.1} parent=11 // pred_check
          %p348 = pneg %p112
        $region22: #{tpu_custom_call.1} parent=11 // pred_check_branch
          %350 = sbr.rel (%p348) target = $region24
        $region23: #{tpu_custom_call.1} parent=11 // pred_region
          _
        $region24: #{tpu_custom_call.1} parent=11 // pred_fallthru
          _
        // Predicated region
        $region25: #{tpu_custom_call.1} parent=11 // pred_check
          %p351 = pneg %p133
        $region26: #{tpu_custom_call.1} parent=11 // pred_check_branch
          %353 = sbr.rel (%p351) target = $region28
        $region27: #{tpu_custom_call.1} parent=11 // pred_region
          _
        $region28: #{tpu_custom_call.1} parent=11 // pred_fallthru
          _
        // Predicated region
        $region29: #{tpu_custom_call.1} parent=11 // pred_check
          %p354 = pneg %p154
        $region30: #{tpu_custom_call.1} parent=11 // pred_check_branch
          %356 = sbr.rel (%p354) target = $region32
        $region31: #{tpu_custom_call.1} parent=11 // pred_region
          _
        $region32: #{tpu_custom_call.1} parent=11 // pred_fallthru
          _
        // Predicated region
        $region33: #{tpu_custom_call.1} parent=11 // pred_check
          %p357 = pneg %p175
        $region34: #{tpu_custom_call.1} parent=11 // pred_check_branch
          %359 = sbr.rel (%p357) target = $region36
        $region35: #{tpu_custom_call.1} parent=11 // pred_region
          _
        $region36: #{tpu_custom_call.1} parent=11 // pred_fallthru
          _
        // Predicated region
        $region37: #{tpu_custom_call.1} parent=11 // pred_check
          %p360 = pneg %p196
        $region38: #{tpu_custom_call.1} parent=11 // pred_check_branch
          %362 = sbr.rel (%p360) target = $region40
        $region39: #{tpu_custom_call.1} parent=11 // pred_region
          %364 = vsyncadd [#allocation3], 0
          %s365 = sshll.u32 %s7, 4
          %s366 = int_to_ptr.hbm [resolvable:$true] %s365
          %s367 = sshll.u32 [#allocation2], 4
          %s368 = int_to_ptr.vmem [resolvable:$true] %s367
          %373 = dma.hbm_to_vmem [thread:$0]  %s366, 256, %s368, [#allocation3], 64, 64, 4
        $region40: #{tpu_custom_call.1} parent=11 // pred_fallthru
          _
        // Predicated region
        $region41: #{tpu_custom_call.1} parent=11 // pred_check
          %p374 = pneg %p217
        $region42: #{tpu_custom_call.1} parent=11 // pred_check_branch
          %376 = sbr.rel (%p374) target = $region44
        $region43: #{tpu_custom_call.1} parent=11 // pred_region
          _
        $region44: #{tpu_custom_call.1} parent=11 // pred_fallthru
          _
        // Predicated region
        $region45: #{tpu_custom_call.1} parent=11 // pred_check
          %p377 = pneg %p238
        $region46: #{tpu_custom_call.1} parent=11 // pred_check_branch
          %379 = sbr.rel (%p377) target = $region48
        $region47: #{tpu_custom_call.1} parent=11 // pred_region
          _
        $region48: #{tpu_custom_call.1} parent=11 // pred_fallthru
          _
        // Predicated region
        $region49: #{tpu_custom_call.1} parent=11 // pred_check
          %p380 = pneg %p259
        $region50: #{tpu_custom_call.1} parent=11 // pred_check_branch
          %382 = sbr.rel (%p380) target = $region52
        $region51: #{tpu_custom_call.1} parent=11 // pred_region
          _
        $region52: #{tpu_custom_call.1} parent=11 // pred_fallthru
          _
        // Predicated region
        $region53: #{tpu_custom_call.1} parent=11 // pred_check
          %p383 = pneg %p280
        $region54: #{tpu_custom_call.1} parent=11 // pred_check_branch
          %385 = sbr.rel (%p383) target = $region56
        $region55: #{tpu_custom_call.1} parent=11 // pred_region
          _
        $region56: #{tpu_custom_call.1} parent=11 // pred_fallthru
          _
        // Predicated region
        $region57: #{tpu_custom_call.1} parent=11 // pred_check
          %p386 = pneg %p301
        $region58: #{tpu_custom_call.1} parent=11 // pred_check_branch
          %388 = sbr.rel (%p386) target = $region60
        $region59: #{tpu_custom_call.1} parent=11 // pred_region
          _
        $region60: #{tpu_custom_call.1} parent=11 // pred_fallthru
          _
      $region12: #{tpu_custom_call.1} parent=5 // pred_fallthru
        _
      %p389 = scmp.lt.s32.totalorder %s23, 2
      // Predicated region
      $region61: #{tpu_custom_call.1} parent=5 // pred_check
        %p390 = pneg %p389
      $region62: #{tpu_custom_call.1} parent=5 // pred_check_branch
        %392 = sbr.rel (%p390) target = $region64
      $region63: #{tpu_custom_call.1} parent=5 // pred_region
        // Predicated region
        $region65: #{tpu_custom_call.1} parent=63 // pred_check
          %p393 = pneg %p43
        $region66: #{tpu_custom_call.1} parent=63 // pred_check_branch
          %395 = sbr.rel (%p393) target = $region68
        $region67: #{tpu_custom_call.1} parent=63 // pred_region
          %p396 = scmp.lt.s32.totalorder %s23, 1
          %s397 = scalar_select %p396, %s23, 1
          %s398 = smul.addr %s397, 8
          %s399 = scalar_lea.vmem %s0, %s398
        $region68: #{tpu_custom_call.1} parent=63 // pred_fallthru
          _
      $region64: #{tpu_custom_call.1} parent=5 // pred_fallthru
        _
      %p400 = scmp.le.s32.totalorder 1, %s23
      %p401 = scmp.lt.s32.totalorder %s23, 3
      %p402 = pnand %p400, %p401
      %p403 = pneg %p402
      // Predicated region
      $region69: #{tpu_custom_call.1} parent=5 // pred_check
        _
      $region70: #{tpu_custom_call.1} parent=5 // pred_check_branch
        %405 = sbr.rel (%p402) target = $region72
      $region71: #{tpu_custom_call.1} parent=5 // pred_region
        %s406 = ssub.s32 %s23, 1
        // Predicated region
        $region73: #{tpu_custom_call.1} parent=71 // pred_check
          %p407 = pneg %p196
        $region74: #{tpu_custom_call.1} parent=71 // pred_check_branch
          %409 = sbr.rel (%p407) target = $region76
        $region75: #{tpu_custom_call.1} parent=71 // pred_region
          %411 = dma.done [#allocation3], 256
        $region76: #{tpu_custom_call.1} parent=71 // pred_fallthru
          _
        %p412 = scmp.lt.s32.totalorder %s28, 1
        %s413 = scalar_select %p412, %s28, 1
        %s414 = smul.addr %s413, 8
        %s415 = scalar_lea.vmem %s0, %s414
        %p416 = pneg %p49
        %p417 = pneg %p46
        %p418 = pneg %p70
        %p419 = pneg %p67
        %p420 = pneg %p91
        %p421 = pneg %p88
        %p422 = pneg %p112
        %p423 = pneg %p109
        %p424 = pneg %p133
        %p425 = pneg %p130
        %p426 = pneg %p154
        %p427 = pneg %p151
        %p428 = pneg %p175
        %p429 = pneg %p172
        %p430 = pneg %p196
        %p431 = pneg %p193
        %p432 = pneg %p217
        %p433 = pneg %p214
        %p434 = pneg %p238
        %p435 = pneg %p235
        %p436 = pneg %p259
        %p437 = pneg %p256
        %p438 = pneg %p280
        %p439 = pneg %p277
        %p440 = pneg %p301
        %p441 = pneg %p298
        %p442 = pneg %p327
        %p443 = pneg %p324
        %s444 = sand.u32 %s314, 1
        %s445 = scalar_lea.sflag [#allocation4], %s444
        %s446 = sand.u32 %s314, 1
        %s447 = smul.addr %s446, 8
        %s448 = scalar_lea.vmem [#allocation5], %s447
        %p449 = scmp.lt.s32.totalorder %s28, 1
        %s450 = scalar_select %p449, %s28, 1
        %s451 = smul.addr %s450, 8
        %s452 = scalar_lea.vmem %s0, %s451
        %v454 = vld [vmem:[%s452] sm:$0xff]
        %v455 = vpack.c.bf16 %v454, %v454
        %v456 = vld [vmem:[%s1] sm:$0xf]
        %v457 = vld [vmem:[%s1 + $0x4] sm:$0xf]
        %v458 = vld [vmem:[%s1 + $0x8] sm:$0xf]
        %v459 = vld [vmem:[%s1 + $0xc] sm:$0xf]
        %v460 = vld [vmem:[%s2] sm:$0x1]
        %v462 = vperm.slane %v460, 0
        %v468 = vunpack.c.l.b16 %v456
        %v469 = vunpack.c.l.b16 %v457
        %v470 = vunpack.c.l.b16 %v458
        %v471 = vunpack.c.l.b16 %v459
        %v472 = vpack.c.b16 %v469, %v468
        %v473 = vpack.c.b16 %v471, %v470
        %vm476 = vcmask 261120
        %v478 = vsel %vm476, %v455, 0
        %480 = vmatpush.bf16.msra.mxu0 0
        %481 = vmatpush.bf16.msra.mxu0 0
        %482 = vmatpush.bf16.msra.mxu0 0
        %483 = vmatpush.bf16.msra.mxu0 0
        %484 = vmatpush.bf16.msra.mxu0 0
        %485 = vmatpush.bf16.msra.mxu0 0
        %486 = vmatpush.bf16.msra.mxu0 %v473
        %487 = vmatpush.bf16.msra.mxu0 %v472
        %488 = vmatmul.bf16.gmra.mxu0 %v478
        %v489 = vpop.f32.mrf.mxu0
        %v490 = vadd.f32 %v462, %v489
        %v491 = vpop.f32.mrf.mxu0
        %492 = vdwg.mxu0
        %v493 = vmul.f32 %v490, 0.35355338
        %v494 = vpack.c.bf16 %v493, %v493
        %v495 = vpack.c.bf16 %v490, %v490
        %v497 = vunpack.c.l.b16 %v495
        %v498 = vpack.c.b16 %v497, %v497
        %499 = vrot.lane.b32.xlu0 %v498, 96
        %v500 = vpop.permute.xlu0 %499
        %vm501 = vcmask 64512
        %v503 = vsel %vm501, %v494, 0
        %v506 = vsel %vm501, %v500, 0
        %508 = vmatpush.bf16.xpose.msra.mxu0 0
        %509 = vmatpush.bf16.xpose.msra.mxu0 0
        %510 = vmatpush.bf16.xpose.msra.mxu0 0
        %511 = vmatpush.bf16.xpose.msra.mxu0 0
        %512 = vmatpush.bf16.xpose.msra.mxu0 0
        %513 = vmatpush.bf16.xpose.msra.mxu0 0
        %514 = vmatpush.bf16.xpose.msra.mxu0 0
        %515 = vmatpush.bf16.xpose.msra.mxu0 %v506
        %516 = vmatmul.bf16.gmra.mxu0 %v503
        %v517 = vpop.f32.mrf.mxu0
        %v518 = vadd.f32 0.0, %v517
        %v519 = vpop.f32.mrf.mxu0
        %520 = vdwg.mxu0
        %v521 = vsel %vm501, %v518, -inf
        %522 = vmax.xlane.f32.xlu0 %v521
        %v523 = vpop.xlane.xlu0 %522
        %v524 = vsub.f32 %v518, %v523
        %v525 = vmul.f32 %v524, 1.442695
        %v526 = vpow.pop %v525
        %v527 = vsel %vm501, %v526, 0.0
        %528 = vadd.xlane.f32.xlu0 %v527
        %v529 = vpop.xlane.xlu0 %528
        %v530 = vrcp.pop %v529
        %v531 = vmul.f32 %v526, %v530
        %v532 = vpack.c.bf16 %v531, %v531
        %533 = vrot.lane.b32.xlu0 %v498, 64
        %v534 = vpop.permute.xlu0 %533
        %v536 = vsel %vm501, %v532, 0
        %vm538 = vcmask 1043456
        %v540 = vsel %vm538, %v534, 0
        %542 = vmatpush.bf16.msra.mxu0 0
        %543 = vmatpush.bf16.msra.mxu0 0
        %544 = vmatpush.bf16.msra.mxu0 0
        %545 = vmatpush.bf16.msra.mxu0 0
        %546 = vmatpush.bf16.msra.mxu0 0
        %547 = vmatpush.bf16.msra.mxu0 0
        %548 = vmatpush.bf16.msra.mxu0 0
        %549 = vmatpush.bf16.msra.mxu0 %v540
        %550 = vmatmul.bf16.gmra.mxu0 %v536
        %v551 = vpop.f32.mrf.mxu0
        %v552 = vadd.f32 0.0, %v551
        %v553 = vpop.f32.mrf.mxu0
        %554 = vdwg.mxu0
        %v555 = vpack.c.bf16 %v552, %v552
        %v556 = vld [vmem:[%s3] sm:$0xf]
        %v558 = vunpack.c.l.b16 %v494
        %v559 = vpack.c.b16 %v558, %v558
        %560 = vrot.lane.b32.xlu0 %v559, 120
        %v561 = vpop.permute.xlu0 %560
        %562 = vrot.lane.b32.xlu0 %v498, 88
        %v563 = vpop.permute.xlu0 %562
        %v565 = vsel %vm501, %v561, 0
        %v568 = vsel %vm501, %v563, 0
        %570 = vmatpush.bf16.xpose.msra.mxu0 0
        %571 = vmatpush.bf16.xpose.msra.mxu0 0
        %572 = vmatpush.bf16.xpose.msra.mxu0 0
        %573 = vmatpush.bf16.xpose.msra.mxu0 0
        %574 = vmatpush.bf16.xpose.msra.mxu0 0
        %575 = vmatpush.bf16.xpose.msra.mxu0 0
        %576 = vmatpush.bf16.xpose.msra.mxu0 0
        %577 = vmatpush.bf16.xpose.msra.mxu0 %v568
        %578 = vmatmul.bf16.gmra.mxu0 %v565
        %v579 = vpop.f32.mrf.mxu0
        %v580 = vadd.f32 0.0, %v579
        %v581 = vpop.f32.mrf.mxu0
        %582 = vdwg.mxu0
        %v583 = vsel %vm501, %v580, -inf
        %584 = vmax.xlane.f32.xlu0 %v583
        %v585 = vpop.xlane.xlu0 %584
        %v586 = vsub.f32 %v580, %v585
        %v587 = vmul.f32 %v586, 1.442695
        %v588 = vpow.pop %v587
        %v589 = vsel %vm501, %v588, 0.0
        %590 = vadd.xlane.f32.xlu0 %v589
        %v591 = vpop.xlane.xlu0 %590
        %v592 = vrcp.pop %v591
        %v593 = vmul.f32 %v588, %v592
        %v594 = vpack.c.bf16 %v593, %v593
        %595 = vrot.lane.b32.xlu0 %v498, 56
        %v596 = vpop.permute.xlu0 %595
        %v598 = vsel %vm501, %v594, 0
        %v601 = vsel %vm538, %v596, 0
        %603 = vmatpush.bf16.msra.mxu0 0
        %604 = vmatpush.bf16.msra.mxu0 0
        %605 = vmatpush.bf16.msra.mxu0 0
        %606 = vmatpush.bf16.msra.mxu0 0
        %607 = vmatpush.bf16.msra.mxu0 0
        %608 = vmatpush.bf16.msra.mxu0 0
        %609 = vmatpush.bf16.msra.mxu0 0
        %610 = vmatpush.bf16.msra.mxu0 %v601
        %611 = vmatmul.bf16.gmra.mxu0 %v598
        %v612 = vpop.f32.mrf.mxu0
        %v613 = vadd.f32 0.0, %v612
        %v614 = vpop.f32.mrf.mxu0
        %615 = vdwg.mxu0
        %v616 = vpack.c.bf16 %v613, %v613
        %v617 = vld [vmem:[%s3 + $0x4] sm:$0xf]
        %v619 = vsel %vm501, %v616, 0
        %v622 = vsel %vm538, %v617, 0
        %624 = vmatpush.bf16.msra.mxu0 0
        %625 = vmatpush.bf16.msra.mxu0 0
        %626 = vmatpush.bf16.msra.mxu0 0
        %627 = vmatpush.bf16.msra.mxu0 0
        %628 = vmatpush.bf16.msra.mxu0 0
        %629 = vmatpush.bf16.msra.mxu0 0
        %630 = vmatpush.bf16.msra.mxu0 0
        %631 = vmatpush.bf16.msra.mxu0 %v622
        %632 = vmatmul.bf16.gmra.mxu0 %v619
        %v633 = vpop.f32.mrf.mxu0
        %v634 = vadd.f32 0.0, %v633
        %v635 = vpop.f32.mrf.mxu0
        %636 = vdwg.mxu0
        %v638 = vsel %vm501, %v555, 0
        %v641 = vsel %vm538, %v556, 0
        %643 = vmatpush.bf16.msra.mxu0 0
        %644 = vmatpush.bf16.msra.mxu0 0
        %645 = vmatpush.bf16.msra.mxu0 0
        %646 = vmatpush.bf16.msra.mxu0 0
        %647 = vmatpush.bf16.msra.mxu0 0
        %648 = vmatpush.bf16.msra.mxu0 0
        %649 = vmatpush.bf16.msra.mxu0 0
        %650 = vmatpush.bf16.msra.mxu0 %v641
        %651 = vmatmul.bf16.gmra.mxu0 %v638
        %v652 = vpop.f32.mrf.mxu0
        %v653 = vadd.f32 %v634, %v652
        %v654 = vpop.f32.mrf.mxu0
        %655 = vdwg.mxu0
        %656 = vrot.lane.b32.xlu0 %v559, 112
        %v657 = vpop.permute.xlu0 %656
        %658 = vrot.lane.b32.xlu0 %v498, 80
        %v659 = vpop.permute.xlu0 %658
        %v661 = vsel %vm501, %v657, 0
        %v664 = vsel %vm501, %v659, 0
        %666 = vmatpush.bf16.xpose.msra.mxu0 0
        %667 = vmatpush.bf16.xpose.msra.mxu0 0
        %668 = vmatpush.bf16.xpose.msra.mxu0 0
        %669 = vmatpush.bf16.xpose.msra.mxu0 0
        %670 = vmatpush.bf16.xpose.msra.mxu0 0
        %671 = vmatpush.bf16.xpose.msra.mxu0 0
        %672 = vmatpush.bf16.xpose.msra.mxu0 0
        %673 = vmatpush.bf16.xpose.msra.mxu0 %v664
        %674 = vmatmul.bf16.gmra.mxu0 %v661
        %v675 = vpop.f32.mrf.mxu0
        %v676 = vadd.f32 0.0, %v675
        %v677 = vpop.f32.mrf.mxu0
        %678 = vdwg.mxu0
        %v679 = vsel %vm501, %v676, -inf
        %680 = vmax.xlane.f32.xlu0 %v679
        %v681 = vpop.xlane.xlu0 %680
        %v682 = vsub.f32 %v676, %v681
        %v683 = vmul.f32 %v682, 1.442695
        %v684 = vpow.pop %v683
        %v685 = vsel %vm501, %v684, 0.0
        %686 = vadd.xlane.f32.xlu0 %v685
        %v687 = vpop.xlane.xlu0 %686
        %v688 = vrcp.pop %v687
        %v689 = vmul.f32 %v684, %v688
        %v690 = vpack.c.bf16 %v689, %v689
        %691 = vrot.lane.b32.xlu0 %v498, 48
        %v692 = vpop.permute.xlu0 %691
        %v694 = vsel %vm501, %v690, 0
        %v697 = vsel %vm538, %v692, 0
        %699 = vmatpush.bf16.msra.mxu0 0
        %700 = vmatpush.bf16.msra.mxu0 0
        %701 = vmatpush.bf16.msra.mxu0 0
        %702 = vmatpush.bf16.msra.mxu0 0
        %703 = vmatpush.bf16.msra.mxu0 0
        %704 = vmatpush.bf16.msra.mxu0 0
        %705 = vmatpush.bf16.msra.mxu0 0
        %706 = vmatpush.bf16.msra.mxu0 %v697
        %707 = vmatmul.bf16.gmra.mxu0 %v694
        %v708 = vpop.f32.mrf.mxu0
        %v709 = vadd.f32 0.0, %v708
        %v710 = vpop.f32.mrf.mxu0
        %711 = vdwg.mxu0
        %v712 = vpack.c.bf16 %v709, %v709
        %v713 = vld [vmem:[%s3 + $0x8] sm:$0xf]
        %v715 = vsel %vm501, %v712, 0
        %v718 = vsel %vm538, %v713, 0
        %720 = vmatpush.bf16.msra.mxu0 0
        %721 = vmatpush.bf16.msra.mxu0 0
        %722 = vmatpush.bf16.msra.mxu0 0
        %723 = vmatpush.bf16.msra.mxu0 0
        %724 = vmatpush.bf16.msra.mxu0 0
        %725 = vmatpush.bf16.msra.mxu0 0
        %726 = vmatpush.bf16.msra.mxu0 0
        %727 = vmatpush.bf16.msra.mxu0 %v718
        %728 = vmatmul.bf16.gmra.mxu0 %v715
        %v729 = vpop.f32.mrf.mxu0
        %v730 = vadd.f32 0.0, %v729
        %v731 = vpop.f32.mrf.mxu0
        %732 = vdwg.mxu0
        %v733 = vadd.f32 %v653, %v730
        %734 = vrot.lane.b32.xlu0 %v559, 104
        %v735 = vpop.permute.xlu0 %734
        %736 = vrot.lane.b32.xlu0 %v498, 72
        %v737 = vpop.permute.xlu0 %736
        %v739 = vsel %vm501, %v735, 0
        %v742 = vsel %vm501, %v737, 0
        %744 = vmatpush.bf16.xpose.msra.mxu0 0
        %745 = vmatpush.bf16.xpose.msra.mxu0 0
        %746 = vmatpush.bf16.xpose.msra.mxu0 0
        %747 = vmatpush.bf16.xpose.msra.mxu0 0
        %748 = vmatpush.bf16.xpose.msra.mxu0 0
        %749 = vmatpush.bf16.xpose.msra.mxu0 0
        %750 = vmatpush.bf16.xpose.msra.mxu0 0
        %751 = vmatpush.bf16.xpose.msra.mxu0 %v742
        %752 = vmatmul.bf16.gmra.mxu0 %v739
        %v753 = vpop.f32.mrf.mxu0
        %v754 = vadd.f32 0.0, %v753
        %v755 = vpop.f32.mrf.mxu0
        %756 = vdwg.mxu0
        %v757 = vsel %vm501, %v754, -inf
        %758 = vmax.xlane.f32.xlu0 %v757
        %v759 = vpop.xlane.xlu0 %758
        %v760 = vsub.f32 %v754, %v759
        %v761 = vmul.f32 %v760, 1.442695
        %v762 = vpow.pop %v761
        %v763 = vsel %vm501, %v762, 0.0
        %764 = vadd.xlane.f32.xlu0 %v763
        %v765 = vpop.xlane.xlu0 %764
        %v766 = vrcp.pop %v765
        %v767 = vmul.f32 %v762, %v766
        %v768 = vpack.c.bf16 %v767, %v767
        %769 = vrot.lane.b32.xlu0 %v498, 40
        %v770 = vpop.permute.xlu0 %769
        %v772 = vsel %vm501, %v768, 0
        %v775 = vsel %vm538, %v770, 0
        %777 = vmatpush.bf16.msra.mxu0 0
        %778 = vmatpush.bf16.msra.mxu0 0
        %779 = vmatpush.bf16.msra.mxu0 0
        %780 = vmatpush.bf16.msra.mxu0 0
        %781 = vmatpush.bf16.msra.mxu0 0
        %782 = vmatpush.bf16.msra.mxu0 0
        %783 = vmatpush.bf16.msra.mxu0 0
        %784 = vmatpush.bf16.msra.mxu0 %v775
        %785 = vmatmul.bf16.gmra.mxu0 %v772
        %v786 = vpop.f32.mrf.mxu0
        %v787 = vadd.f32 0.0, %v786
        %v788 = vpop.f32.mrf.mxu0
        %789 = vdwg.mxu0
        %v790 = vpack.c.bf16 %v787, %v787
        %v791 = vld [vmem:[%s3 + $0xc] sm:$0xf]
        %v793 = vsel %vm501, %v790, 0
        %v796 = vsel %vm538, %v791, 0
        %798 = vmatpush.bf16.msra.mxu0 0
        %799 = vmatpush.bf16.msra.mxu0 0
        %800 = vmatpush.bf16.msra.mxu0 0
        %801 = vmatpush.bf16.msra.mxu0 0
        %802 = vmatpush.bf16.msra.mxu0 0
        %803 = vmatpush.bf16.msra.mxu0 0
        %804 = vmatpush.bf16.msra.mxu0 0
        %805 = vmatpush.bf16.msra.mxu0 %v796
        %806 = vmatmul.bf16.gmra.mxu0 %v793
        %v807 = vpop.f32.mrf.mxu0
        %v808 = vadd.f32 0.0, %v807
        %v809 = vpop.f32.mrf.mxu0
        %810 = vdwg.mxu0
        %v811 = vadd.f32 %v733, %v808
        %v812 = vld [vmem:[%s4] sm:$0x1]
        %v814 = vperm.slane %v812, 0
        %v816 = vadd.f32 %v811, %v814
        %v817 = vadd.f32 %v454, %v816
        %v818 = vld [vmem:[%s5] sm:$0x1]
        %v819 = vld [vmem:[%s6] sm:$0x1]
        %v820 = vsel %vm476, %v817, 0.0
        %821 = vadd.xlane.f32.xlu0 %v820
        %v822 = vpop.xlane.xlu0 %821
        %v823 = vmul.f32 %v822, 0.03125
        %v824 = vsub.f32 %v817, %v823
        %v825 = vmul.f32 %v824, %v824
        %v826 = vsel %vm476, %v825, 0.0
        %827 = vadd.xlane.f32.xlu0 %v826
        %v828 = vpop.xlane.xlu0 %827
        %v829 = vmul.f32 %v828, 0.03125
        %v830 = vadd.f32 %v829, 1e-05
        %v831 = vrsqrt.pop %v830
        %v832 = vmul.f32 %v831, %v830
        %v833 = vmul.f32 %v832, %v831
        %v834 = vmul.f32 0.5, %v833
        %v835 = vsub.f32 1.5, %v834
        %v836 = vmul.f32 %v831, %v835
        %vm837 = vweird.f32 %v830
        %vm838 = vweird.f32 %v831
        %vm839 = vmor %vm837, %vm838
        %v840 = vsel %vm839, %v831, %v836
        %v841 = vmul.f32 %v824, %v840
        %v843 = vperm.slane %v818, 0
        %v845 = vmul.f32 %v841, %v843
        %v847 = vperm.slane %v819, 0
        %v849 = vadd.f32 %v845, %v847
        %v850 = vpack.c.bf16 %v849, %v849
        %v851 = vld [vmem:[#allocation2] sm:$0xf]
        %v852 = vld [vmem:[#allocation2 + $0x4] sm:$0xf]
        %v853 = vld [vmem:[#allocation2 + $0x8] sm:$0xf]
        %v854 = vld [vmem:[#allocation2 + $0xc] sm:$0xf]
        %v855 = vld [vmem:[%s8] sm:$0x1]
        %v857 = vperm.slane %v855, 0
        %v863 = vunpack.c.l.b16 %v851
        %v864 = vunpack.c.l.b16 %v852
        %v865 = vunpack.c.l.b16 %v853
        %v866 = vunpack.c.l.b16 %v854
        %v867 = vpack.c.b16 %v864, %v863
        %v868 = vpack.c.b16 %v866, %v865
        %v872 = vsel %vm476, %v850, 0
        %874 = vmatpush.bf16.msra.mxu0 0
        %875 = vmatpush.bf16.msra.mxu0 0
        %876 = vmatpush.bf16.msra.mxu0 0
        %877 = vmatpush.bf16.msra.mxu0 0
        %878 = vmatpush.bf16.msra.mxu0 0
        %879 = vmatpush.bf16.msra.mxu0 0
        %880 = vmatpush.bf16.msra.mxu0 %v868
        %881 = vmatpush.bf16.msra.mxu0 %v867
        %882 = vmatmul.bf16.gmra.mxu0 %v872
        %v883 = vpop.f32.mrf.mxu0
        %v884 = vadd.f32 %v857, %v883
        %v885 = vpop.f32.mrf.mxu0
        %886 = vdwg.mxu0
        %v887 = vmax.f32 %v884, 0.0
        %v888 = vpack.c.bf16 %v887, %v887
        %v889 = vld [vmem:[%s9] sm:$0xf]
        %v890 = vld [vmem:[%s9 + $0x4] sm:$0xf]
        %v891 = vld [vmem:[%s9 + $0x8] sm:$0xf]
        %v892 = vld [vmem:[%s9 + $0xc] sm:$0xf]
        %v893 = vld [vmem:[%s9 + $0x10] sm:$0xf]
        %v894 = vld [vmem:[%s9 + $0x14] sm:$0xf]
        %v895 = vld [vmem:[%s9 + $0x18] sm:$0xf]
        %v896 = vld [vmem:[%s9 + $0x1c] sm:$0xf]
        %v897 = vld [vmem:[%s10] sm:$0x1]
        %v899 = vperm.slane %v897, 0
        %v909 = vunpack.c.l.b16 %v889
        %v910 = vunpack.c.l.b16 %v890
        %v911 = vunpack.c.l.b16 %v891
        %v912 = vunpack.c.l.b16 %v892
        %v913 = vunpack.c.l.b16 %v893
        %v914 = vunpack.c.l.b16 %v894
        %v915 = vunpack.c.l.b16 %v895
        %v916 = vunpack.c.l.b16 %v896
        %v917 = vpack.c.b16 %v910, %v909
        %v918 = vpack.c.b16 %v912, %v911
        %v919 = vpack.c.b16 %v914, %v913
        %v920 = vpack.c.b16 %v916, %v915
        %vm925 = vcmask 523264
        %v927 = vsel %vm925, %v888, 0
        %929 = vmatpush.bf16.msra.mxu0 0
        %930 = vmatpush.bf16.msra.mxu0 0
        %931 = vmatpush.bf16.msra.mxu0 0
        %932 = vmatpush.bf16.msra.mxu0 0
        %933 = vmatpush.bf16.msra.mxu0 %v920
        %934 = vmatpush.bf16.msra.mxu0 %v919
        %935 = vmatpush.bf16.msra.mxu0 %v918
        %936 = vmatpush.bf16.msra.mxu0 %v917
        %937 = vmatmul.bf16.gmra.mxu0 %v927
        %v938 = vpop.f32.mrf.mxu0
        %v939 = vadd.f32 %v899, %v938
        %v940 = vpop.f32.mrf.mxu0
        %941 = vdwg.mxu0
        %v942 = vadd.f32 %v849, %v939
        %v943 = vld [vmem:[%s11] sm:$0x1]
        %v944 = vld [vmem:[%s12] sm:$0x1]
        %v945 = vsel %vm476, %v942, 0.0
        %946 = vadd.xlane.f32.xlu0 %v945
        %v947 = vpop.xlane.xlu0 %946
        %v948 = vmul.f32 %v947, 0.03125
        %v949 = vsub.f32 %v942, %v948
        %v950 = vmul.f32 %v949, %v949
        %v951 = vsel %vm476, %v950, 0.0
        %952 = vadd.xlane.f32.xlu0 %v951
        %v953 = vpop.xlane.xlu0 %952
        %v954 = vmul.f32 %v953, 0.03125
        %v955 = vadd.f32 %v954, 1e-05
        %v956 = vrsqrt.pop %v955
        %v957 = vmul.f32 %v956, %v955
        %v958 = vmul.f32 %v957, %v956
        %v959 = vmul.f32 0.5, %v958
        %v960 = vsub.f32 1.5, %v959
        %v961 = vmul.f32 %v956, %v960
        %vm962 = vweird.f32 %v955
        %vm963 = vweird.f32 %v956
        %vm964 = vmor %vm962, %vm963
        %v965 = vsel %vm964, %v956, %v961
        %v966 = vmul.f32 %v949, %v965
        %v968 = vperm.slane %v943, 0
        %v970 = vmul.f32 %v966, %v968
        %v972 = vperm.slane %v944, 0
        %v974 = vadd.f32 %v970, %v972
        %975 = vst.msk [vmem:[%s448] sm:$0xff] %vm476, %v974
        %s976 = sand.u32 %s314, 1
        %s977 = scalar_lea.sflag [#allocation4], %s976
        %s978 = sand.u32 %s314, 1
        %s979 = smul.addr %s978, 8
        %s980 = scalar_lea.vmem [#allocation5], %s979
        // Predicated region
        $region77: #{tpu_custom_call.1} parent=71 // pred_check
          %p981 = pneg %p324
        $region78: #{tpu_custom_call.1} parent=71 // pred_check_branch
          %983 = sbr.rel (%p981) target = $region80
        $region79: #{tpu_custom_call.1} parent=71 // pred_region
          %985 = vsyncadd %s977, 0
          %s986 = smul.addr %s28, 8
          %s987 = scalar_lea.hbm %s13, %s986
          %s989 = sshll.u32 %s980, 4
          %s990 = int_to_ptr.vmem [resolvable:$true] %s989
          %s991 = sshll.u32 %s987, 4
          %s992 = int_to_ptr.hbm [resolvable:$true] %s991
          %994 = dma.vmem_to_hbm [thread:$0]  %s990, 128, %s992, %s977
        $region80: #{tpu_custom_call.1} parent=71 // pred_fallthru
          _
      $region72: #{tpu_custom_call.1} parent=5 // pred_fallthru
        _
      %p995 = scmp.le.s32.totalorder 2, %s23
      // Predicated region
      $region81: #{tpu_custom_call.1} parent=5 // pred_check
        %p996 = pneg %p995
      $region82: #{tpu_custom_call.1} parent=5 // pred_check_branch
        %998 = sbr.rel (%p996) target = $region84
      $region83: #{tpu_custom_call.1} parent=5 // pred_region
        %s999 = ssub.s32 %s23, 2
        // Predicated region
        $region85: #{tpu_custom_call.1} parent=83 // pred_check
          %p1000 = pneg %p330
        $region86: #{tpu_custom_call.1} parent=83 // pred_check_branch
          %1002 = sbr.rel (%p1000) target = $region88
        $region87: #{tpu_custom_call.1} parent=83 // pred_region
          %s1003 = sand.u32 %s315, 1
          %s1004 = scalar_lea.sflag [#allocation4], %s1003
          %s1005 = sand.u32 %s315, 1
          %s1006 = smul.addr %s1005, 8
          %s1007 = scalar_lea.vmem [#allocation5], %s1006
          %1009 = dma.done %s1004, 128
        $region88: #{tpu_custom_call.1} parent=83 // pred_fallthru
          _
      $region84: #{tpu_custom_call.1} parent=5 // pred_fallthru
        _
    $region6: #{tpu_custom_call.1} parent=1 // loop_footer
      %s27 = sadd.s32 1, %s23
    $region7: #{tpu_custom_call.1} parent=1 // loop_footer_branch
      %22 = sbr.rel target = $region3
    $region8: #{tpu_custom_call.1} parent=1 // loop_exit
      _
    %1010 = vsyncpa [#allocation3], 1
    %s1011 = scalar_lea.sflag [#allocation3], 1
    %1012 = vsyncpa %s1011, 1
    %1013 = vsyncpa [#allocation4], 1
    %s1014 = scalar_lea.sflag [#allocation4], 1
    %1015 = vsyncpa %s1014, 1

</llo_original>
